<compile_context>
chip_gen: v7x
topology: tpu7x:2x2x1
jax: 0.10.0
libtpu: 0.0.40
codegen_flags: <defaults>
</compile_context>

<pallas_src>
import functools

import jax
import jax.numpy as jnp
from jax.experimental import pallas as pl
from jax.experimental.pallas import tpu as pltpu

NEG_SLOPE = 0.01      # nn.LeakyReLU() default negative_slope
LANE = 128
BATCH_GRAIN = 16      # bf16 sublane packing grain


def _round_up(x, m):
    return ((x + m - 1) // m) * m


def _vmem_capacity_bytes():
    try:
        return int(pltpu.get_tpu_info().vmem_capacity_bytes)
    except Exception:
        return 64 << 20   # conservative default: v7x per-TensorCore VMEM


# ----------------------------------------------------------------------------
# Fused kernel: 5-layer MLP forward for one batch tile, all weights VMEM-resident
# ----------------------------------------------------------------------------
def _gen_mlp_kernel(x_ref,
                    w1_ref, b1_ref, w2_ref, b2_ref, w3_ref, b3_ref,
                    w4_ref, b4_ref, w5_ref, b5_ref,
                    o_ref):
    cdt = w1_ref.dtype                 # MXU operand dtype (bf16 or f32)

    def layer(h, w_ref, b_ref, *, activate):
        acc = jnp.dot(h, w_ref[...], preferred_element_type=jnp.float32)
        acc = acc + b_ref[...]         # bias add in f32 (VPU)
        if activate:
            # LeakyReLU(h) = max(h, 0.01*h)  (one vmul + one vmax per element)
            acc = jnp.maximum(acc, NEG_SLOPE * acc)
        return acc

    h = x_ref[...]                     # already in compute dtype (cast in wrapper)
    h = layer(h, w1_ref, b1_ref, activate=True).astype(cdt)
    h = layer(h, w2_ref, b2_ref, activate=True).astype(cdt)
    h = layer(h, w3_ref, b3_ref, activate=True).astype(cdt)
    h = layer(h, w4_ref, b4_ref, activate=True).astype(cdt)
    o_ref[...] = layer(h, w5_ref, b5_ref, activate=False)   # f32 output


# ----------------------------------------------------------------------------
# Fallback kernel: one Linear (+ optional LeakyReLU), tiled over (M, N, K).
# Used when the fused design's weights cannot all be VMEM-resident.
# ----------------------------------------------------------------------------
def _linear_kernel(x_ref, w_ref, b_ref, o_ref, acc_ref, *, activate):
    @pl.when(pl.program_id(2) == 0)
    def _():
        acc_ref[...] = jnp.zeros_like(acc_ref)

    acc_ref[...] += jnp.dot(x_ref[...], w_ref[...],
                            preferred_element_type=jnp.float32)

    @pl.when(pl.program_id(2) == pl.num_programs(2) - 1)
    def _():
        r = acc_ref[...] + b_ref[...]
        if activate:
            r = jnp.maximum(r, NEG_SLOPE * r)
        o_ref[...] = r.astype(o_ref.dtype)


def _linear_pallas(x, w, b, *, activate, out_dtype, tm):
    M, K = x.shape
    _, N = w.shape
    tn = 256 if N % 256 == 0 else 128
    tk = 512 if K % 512 == 0 else (256 if K % 256 == 0 else 128)
    grid = (M // tm, N // tn, K // tk)
    return pl.pallas_call(
        functools.partial(_linear_kernel, activate=activate),
        out_shape=jax.ShapeDtypeStruct((M, N), out_dtype),
        grid_spec=pltpu.PrefetchScalarGridSpec(
            num_scalar_prefetch=0,
            grid=grid,
            in_specs=[
                pl.BlockSpec((tm, tk), lambda i, j, k: (i, k)),
                pl.BlockSpec((tk, tn), lambda i, j, k: (k, j)),
                pl.BlockSpec((1, tn), lambda i, j, k: (0, j)),
            ],
            out_specs=pl.BlockSpec((tm, tn), lambda i, j, k: (i, j)),
            scratch_shapes=[pltpu.VMEM((tm, tn), jnp.float32)],
        ),
        compiler_params=pltpu.CompilerParams(
            dimension_semantics=("parallel", "parallel", "arbitrary")),
    )(x, w, b)


def _gen_forward_fallback(x, flat_args, dims, compute_dtype):
    in_size, out_size = dims
    B = x.shape[0]
    in_p = flat_args[0].shape[0]
    out_p = flat_args[-2].shape[1]

    tm = min(256, _round_up(max(B, 1), BATCH_GRAIN))
    B_pad = _round_up(max(B, 1), tm)

    h = jnp.zeros((B_pad, in_p), compute_dtype).at[:B, :in_size].set(
        jnp.asarray(x).astype(compute_dtype))

    n_layers = len(flat_args) // 2
    for li in range(n_layers):
        w = flat_args[2 * li]
        bias = flat_args[2 * li + 1]
        last = li == n_layers - 1
        h = _linear_pallas(h, w, bias, activate=not last,
                           out_dtype=jnp.float32 if last else compute_dtype,
                           tm=tm)
    if B_pad == B and out_p == out_size:
        return h
    return h[:B, :out_size]


# ----------------------------------------------------------------------------
# One-time parameter preparation (keep OUT of the per-forward path)
# ----------------------------------------------------------------------------
def prepare_gen_params(params, *, compute_dtype=jnp.bfloat16):
    """params: list of 5 (W, b), W shaped (out,in) like nn.Linear, b shaped (out,).

    Returns (flat_args, dims):
      flat_args alternates padded W^T of shape (in_p, out_p) in `compute_dtype`
      and padded bias of shape (1, out_p) in float32.
      dims = (in_size, out_size).
    Zero padding keeps padded feature columns exactly zero through every layer.
    """
    in_size = params[0][0].shape[1]
    out_size = params[-1][0].shape[0]
    flat = []
    for W, b in params:
        W = jnp.asarray(W, jnp.float32)
        b = jnp.asarray(b, jnp.float32)
        fo, fi = W.shape
        fi_p, fo_p = _round_up(fi, LANE), _round_up(fo, LANE)
        Wt = jnp.zeros((fi_p, fo_p), compute_dtype).at[:fi, :fo].set(
            W.T.astype(compute_dtype))
        bp = jnp.zeros((1, fo_p), jnp.float32).at[:, :fo].set(b[None, :])
        flat.append(Wt)
        flat.append(bp)
    return flat, (in_size, out_size)


# ----------------------------------------------------------------------------
# Fused-path pallas_call builder
# ----------------------------------------------------------------------------
def _fused_pallas_call(xp, flat_args, batch_tile, out_p, *,
                       single_buffer_weights, vmem_limit, cost):
    B_pad, in_p = xp.shape
    grid = (B_pad // batch_tile,)

    x_spec = pl.BlockSpec((batch_tile, in_p), lambda i: (i, 0))
    if single_buffer_weights:
        # Grid-invariant operands: nothing to double-buffer -> single VMEM copy.
        wb_specs = [pl.BlockSpec(a.shape, lambda i: (0, 0),
                                 pipeline_mode=pl.Buffered(1))
                    for a in flat_args]
    else:
        wb_specs = [pl.BlockSpec(a.shape, lambda i: (0, 0)) for a in flat_args]
    out_spec = pl.BlockSpec((batch_tile, out_p), lambda i: (i, 0))

    return pl.pallas_call(
        _gen_mlp_kernel,
        out_shape=jax.ShapeDtypeStruct((B_pad, out_p), jnp.float32),
        grid_spec=pltpu.PrefetchScalarGridSpec(
            num_scalar_prefetch=0,
            grid=grid,
            in_specs=[x_spec] + wb_specs,
            out_specs=out_spec,
        ),
        compiler_params=pltpu.CompilerParams(
            dimension_semantics=("parallel",),
            vmem_limit_bytes=vmem_limit,
        ),
        cost_estimate=cost,
    )(xp, *flat_args)


_BUFFERED1_OK = None   # cached: does this jax accept pl.Buffered(1) on BlockSpec?


# ----------------------------------------------------------------------------
# Forward wrapper
# ----------------------------------------------------------------------------
def gen_forward(x, flat_args, dims, *, batch_tile=None, force_fallback=False):
    global _BUFFERED1_OK
    in_size, out_size = dims
    x = jnp.asarray(x)
    B = x.shape[0]
    cdt = flat_args[0].dtype
    cdt_size = jnp.dtype(cdt).itemsize
    in_p = flat_args[0].shape[0]
    hid_p = flat_args[2].shape[0]
    out_p = flat_args[-2].shape[1]

    wb_bytes = sum(int(a.size) * jnp.dtype(a.dtype).itemsize for a in flat_args)
    vmem_cap = _vmem_capacity_bytes()
    budget = vmem_cap - (8 << 20)
    feat_max = max(in_p, hid_p, out_p)

    def footprint(tile, wb_factor):
        io = 2 * tile * in_p * cdt_size + 2 * tile * out_p * 4   # x/out double-buffered
        act = 6 * tile * feat_max * 4                            # f32 intermediates
        return wb_factor * wb_bytes + io + act + (2 << 20)

    B16 = _round_up(max(B, 1), BATCH_GRAIN)

    # Pick the largest batch tile whose resident footprint fits this chip's VMEM.
    chosen_tile = None
    if not force_fallback:
        wb_factor = 1 if _BUFFERED1_OK in (None, True) else 2
        candidates = ([batch_tile] if batch_tile is not None
                      else [1024, 512, 256, 128, 64, 32, 16])
        for t in candidates:
            t = min(_round_up(int(t), BATCH_GRAIN), B16)
            if footprint(t, wb_factor) <= budget:
                chosen_tile = t
                break

    if chosen_tile is None:
        # Weights exceed VMEM residency (or fallback forced): per-layer tiled matmuls.
        return _gen_forward_fallback(x, flat_args, dims, cdt)

    # Grid shaping: pad batch only to the 16-row grain; keep the tile count even
    # when multi-tile so v7x megacore splits evenly.
    grid_n = max(1, pl.cdiv(B16, chosen_tile))
    if grid_n > 1 and grid_n % 2 == 1:
        grid_n += 1
    batch_tile = _round_up(pl.cdiv(B16, grid_n), BATCH_GRAIN)
    B_pad = batch_tile * grid_n

    # Pad + cast x in one shot (bf16 halves the x DMA); skip when already aligned.
    if B_pad == B and in_p == in_size and x.dtype == cdt:
        xp = x
    elif B_pad == B and in_p == in_size:
        xp = x.astype(cdt)
    else:
        xp = jnp.zeros((B_pad, in_p), cdt).at[:B, :in_size].set(x.astype(cdt))

    flops = 2 * B_pad * sum(
        flat_args[2 * i].shape[0] * flat_args[2 * i].shape[1]
        for i in range(len(flat_args) // 2))
    bytes_accessed = wb_bytes + B_pad * in_p * cdt_size + B_pad * out_p * 4
    cost = pl.CostEstimate(flops=flops, transcendentals=0,
                           bytes_accessed=bytes_accessed)

    def run(single_buffer):
        wb_factor = 1 if single_buffer else 2
        vmem_limit = footprint(batch_tile, wb_factor) + (4 << 20)
        vmem_limit = int(min(max(vmem_limit, 16 << 20), vmem_cap - (4 << 20)))
        return _fused_pallas_call(xp, flat_args, batch_tile, out_p,
                                  single_buffer_weights=single_buffer,
                                  vmem_limit=vmem_limit, cost=cost)

    if _BUFFERED1_OK is None:
        try:
            out = run(True)
            _BUFFERED1_OK = True
        except Exception:
            _BUFFERED1_OK = False
            out = run(False)
    else:
        out = run(_BUFFERED1_OK)

    if B_pad == B and out_p == out_size:
        return out
    return out[:B, :out_size]


# ----------------------------------------------------------------------------
# Reference + init (nn.Linear-style shapes)
# ----------------------------------------------------------------------------
def init_gen_params(key, in_size, hid_size, out_size):
    dims = [(in_size, hid_size), (hid_size, hid_size), (hid_size, hid_size),
            (hid_size, hid_size), (hid_size, out_size)]
    params = []
    for (fan_in, fan_out) in dims:
        key, kw, kb = jax.random.split(key, 3)
        bound = 1.0 / jnp.sqrt(fan_in)  # PyTorch default uniform bound
        W = jax.random.uniform(kw, (fan_out, fan_in), jnp.float32, -bound, bound)
        b = jax.random.uniform(kb, (fan_out,), jnp.float32, -bound, bound)
        params.append((W, b))
    return params


def reference_forward(x, params):
    h = jnp.asarray(x, jnp.float32)
    for i, (W, b) in enumerate(params):
        h = jnp.dot(h, W.T, precision=jax.lax.Precision.HIGHEST) + b
        if i < len(params) - 1:
            h = jnp.where(h > 0, h, NEG_SLOPE * h)
    return h


if __name__ == "__main__":
    key = jax.random.PRNGKey(0)
    kx, kx2, kp = jax.random.split(key, 3)

    batch, in_size, hid_size, out_size = 8, 16, 32, 16
    x = jax.random.normal(kx, (batch, in_size), jnp.float32)
    params = init_gen_params(kp, in_size, hid_size, out_size)
    ref = reference_forward(x, params)

    # One-time parameter prep (transpose + pad (+ dtype cast)), off the forward path.
    flat_bf16, dims = prepare_gen_params(params, compute_dtype=jnp.bfloat16)
    flat_f32, _ = prepare_gen_params(params, compute_dtype=jnp.float32)

    # 1) fused path, bf16 MXU operands (single tile, grid=1)
    out = jax.block_until_ready(gen_forward(x, flat_bf16, dims))
    assert out.shape == (batch, out_size)
    assert jnp.allclose(out, ref, atol=3e-2, rtol=3e-2), "bf16 fused mismatch"

    # 2) fused path, full f32 compute (tight tolerance; configurable compute_dtype)
    out_f32 = jax.block_until_ready(gen_forward(x, flat_f32, dims))
    assert jnp.allclose(out_f32, ref, atol=1e-4, rtol=1e-4), "f32 fused mismatch"

    # 3) multi-tile batch: 512 rows -> 2 parallel grid steps of 256
    x2 = jax.random.normal(kx2, (512, in_size), jnp.float32)
    ref2 = reference_forward(x2, params)
    out2 = jax.block_until_ready(gen_forward(x2, flat_bf16, dims, batch_tile=256))
    assert out2.shape == (512, out_size)
    assert jnp.allclose(out2, ref2, atol=3e-2, rtol=3e-2), "tiled mismatch"

    # 4) ragged batch: B=260 pads only to 272 rows (16-row grain), not a full tile
    x3 = x2[:260]
    out3 = jax.block_until_ready(gen_forward(x3, flat_bf16, dims))
    assert out3.shape == (260, out_size)
    assert jnp.allclose(out3, ref2[:260], atol=3e-2, rtol=3e-2), "ragged mismatch"

    # 5) forced fallback (per-layer tiled matmul): scaling path for weights that
    #    would exceed VMEM residency on the current chip.
    out4 = jax.block_until_ready(
        gen_forward(x2, flat_bf16, dims, force_fallback=True))
    assert jnp.allclose(out4, ref2, atol=3e-2, rtol=3e-2), "fallback mismatch"

    print("KERNEL_OK")
</pallas_src>

<mosaic_0001>
module attributes {stable_mosaic.version = 11 : i64} {
  func.func @_gen_mlp_kernel(%arg0: i32, %arg1: memref<16x128xbf16, #tpu.memory_space<vmem>>, %arg2: memref<128x128xbf16, #tpu.memory_space<vmem>>, %arg3: memref<1x128xf32, #tpu.memory_space<vmem>>, %arg4: memref<128x128xbf16, #tpu.memory_space<vmem>>, %arg5: memref<1x128xf32, #tpu.memory_space<vmem>>, %arg6: memref<128x128xbf16, #tpu.memory_space<vmem>>, %arg7: memref<1x128xf32, #tpu.memory_space<vmem>>, %arg8: memref<128x128xbf16, #tpu.memory_space<vmem>>, %arg9: memref<1x128xf32, #tpu.memory_space<vmem>>, %arg10: memref<128x128xbf16, #tpu.memory_space<vmem>>, %arg11: memref<1x128xf32, #tpu.memory_space<vmem>>, %arg12: memref<16x128xf32, #tpu.memory_space<vmem>>) attributes {dimension_semantics = [#tpu.dimension_semantics<parallel>], iteration_bounds = array<i64: 1>, scalar_prefetch = 0 : i64, scratch_operands = 0 : i64, tpu.core_type = #tpu.core_type<tc>, window_params = [{transform_indices = @transform_0, window_bounds = array<i64: 16, 128>}, {pipeline_mode = #tpu.pipeline_mode<synchronous>, transform_indices = @transform_1, window_bounds = array<i64: 128, 128>}, {pipeline_mode = #tpu.pipeline_mode<synchronous>, transform_indices = @transform_2, window_bounds = array<i64: 1, 128>}, {pipeline_mode = #tpu.pipeline_mode<synchronous>, transform_indices = @transform_3, window_bounds = array<i64: 128, 128>}, {pipeline_mode = #tpu.pipeline_mode<synchronous>, transform_indices = @transform_4, window_bounds = array<i64: 1, 128>}, {pipeline_mode = #tpu.pipeline_mode<synchronous>, transform_indices = @transform_5, window_bounds = array<i64: 128, 128>}, {pipeline_mode = #tpu.pipeline_mode<synchronous>, transform_indices = @transform_6, window_bounds = array<i64: 1, 128>}, {pipeline_mode = #tpu.pipeline_mode<synchronous>, transform_indices = @transform_7, window_bounds = array<i64: 128, 128>}, {pipeline_mode = #tpu.pipeline_mode<synchronous>, transform_indices = @transform_8, window_bounds = array<i64: 1, 128>}, {pipeline_mode = #tpu.pipeline_mode<synchronous>, transform_indices = @transform_9, window_bounds = array<i64: 128, 128>}, {pipeline_mode = #tpu.pipeline_mode<synchronous>, transform_indices = @transform_10, window_bounds = array<i64: 1, 128>}, {transform_indices = @transform_11, window_bounds = array<i64: 16, 128>}]} {
    %c0 = arith.constant 0 : index
    %c0_0 = arith.constant 0 : index
    %0 = vector.load %arg1[%c0, %c0_0] : memref<16x128xbf16, #tpu.memory_space<vmem>>, vector<16x128xbf16>
    %c0_1 = arith.constant 0 : index
    %c0_2 = arith.constant 0 : index
    %1 = vector.load %arg2[%c0_1, %c0_2] : memref<128x128xbf16, #tpu.memory_space<vmem>>, vector<128x128xbf16>
    %cst = arith.constant dense<0.000000e+00> : vector<16x128xf32>
    %2 = tpu.matmul %0, %1, %cst {dimension_numbers = #tpu.dot_dimension_numbers<[1], [0], [0], [1], [0, 0, 1, 1], [], []>} : vector<16x128xbf16>, vector<128x128xbf16>, vector<16x128xf32> -> vector<16x128xf32>
    %c0_3 = arith.constant 0 : index
    %c0_4 = arith.constant 0 : index
    %3 = vector.load %arg3[%c0_3, %c0_4] : memref<1x128xf32, #tpu.memory_space<vmem>>, vector<1x128xf32>
    %4 = vector.broadcast %3 : vector<1x128xf32> to vector<16x128xf32>
    %5 = arith.addf %2, %4 : vector<16x128xf32>
    %cst_5 = arith.constant 0.00999999977 : f32
    %6 = vector.broadcast %cst_5 : f32 to vector<16x128xf32>
    %7 = arith.mulf %6, %5 : vector<16x128xf32>
    %8 = arith.maximumf %5, %7 : vector<16x128xf32>
    %9 = arith.truncf %8 : vector<16x128xf32> to vector<16x128xbf16>
    %c0_6 = arith.constant 0 : index
    %c0_7 = arith.constant 0 : index
    %10 = vector.load %arg4[%c0_6, %c0_7] : memref<128x128xbf16, #tpu.memory_space<vmem>>, vector<128x128xbf16>
    %cst_8 = arith.constant dense<0.000000e+00> : vector<16x128xf32>
    %11 = tpu.matmul %9, %10, %cst_8 {dimension_numbers = #tpu.dot_dimension_numbers<[1], [0], [0], [1], [0, 0, 1, 1], [], []>} : vector<16x128xbf16>, vector<128x128xbf16>, vector<16x128xf32> -> vector<16x128xf32>
    %c0_9 = arith.constant 0 : index
    %c0_10 = arith.constant 0 : index
    %12 = vector.load %arg5[%c0_9, %c0_10] : memref<1x128xf32, #tpu.memory_space<vmem>>, vector<1x128xf32>
    %13 = vector.broadcast %12 : vector<1x128xf32> to vector<16x128xf32>
    %14 = arith.addf %11, %13 : vector<16x128xf32>
    %cst_11 = arith.constant 0.00999999977 : f32
    %15 = vector.broadcast %cst_11 : f32 to vector<16x128xf32>
    %16 = arith.mulf %15, %14 : vector<16x128xf32>
    %17 = arith.maximumf %14, %16 : vector<16x128xf32>
    %18 = arith.truncf %17 : vector<16x128xf32> to vector<16x128xbf16>
    %c0_12 = arith.constant 0 : index
    %c0_13 = arith.constant 0 : index
    %19 = vector.load %arg6[%c0_12, %c0_13] : memref<128x128xbf16, #tpu.memory_space<vmem>>, vector<128x128xbf16>
    %cst_14 = arith.constant dense<0.000000e+00> : vector<16x128xf32>
    %20 = tpu.matmul %18, %19, %cst_14 {dimension_numbers = #tpu.dot_dimension_numbers<[1], [0], [0], [1], [0, 0, 1, 1], [], []>} : vector<16x128xbf16>, vector<128x128xbf16>, vector<16x128xf32> -> vector<16x128xf32>
    %c0_15 = arith.constant 0 : index
    %c0_16 = arith.constant 0 : index
    %21 = vector.load %arg7[%c0_15, %c0_16] : memref<1x128xf32, #tpu.memory_space<vmem>>, vector<1x128xf32>
    %22 = vector.broadcast %21 : vector<1x128xf32> to vector<16x128xf32>
    %23 = arith.addf %20, %22 : vector<16x128xf32>
    %cst_17 = arith.constant 0.00999999977 : f32
    %24 = vector.broadcast %cst_17 : f32 to vector<16x128xf32>
    %25 = arith.mulf %24, %23 : vector<16x128xf32>
    %26 = arith.maximumf %23, %25 : vector<16x128xf32>
    %27 = arith.truncf %26 : vector<16x128xf32> to vector<16x128xbf16>
    %c0_18 = arith.constant 0 : index
    %c0_19 = arith.constant 0 : index
    %28 = vector.load %arg8[%c0_18, %c0_19] : memref<128x128xbf16, #tpu.memory_space<vmem>>, vector<128x128xbf16>
    %cst_20 = arith.constant dense<0.000000e+00> : vector<16x128xf32>
    %29 = tpu.matmul %27, %28, %cst_20 {dimension_numbers = #tpu.dot_dimension_numbers<[1], [0], [0], [1], [0, 0, 1, 1], [], []>} : vector<16x128xbf16>, vector<128x128xbf16>, vector<16x128xf32> -> vector<16x128xf32>
    %c0_21 = arith.constant 0 : index
    %c0_22 = arith.constant 0 : index
    %30 = vector.load %arg9[%c0_21, %c0_22] : memref<1x128xf32, #tpu.memory_space<vmem>>, vector<1x128xf32>
    %31 = vector.broadcast %30 : vector<1x128xf32> to vector<16x128xf32>
    %32 = arith.addf %29, %31 : vector<16x128xf32>
    %cst_23 = arith.constant 0.00999999977 : f32
    %33 = vector.broadcast %cst_23 : f32 to vector<16x128xf32>
    %34 = arith.mulf %33, %32 : vector<16x128xf32>
    %35 = arith.maximumf %32, %34 : vector<16x128xf32>
    %36 = arith.truncf %35 : vector<16x128xf32> to vector<16x128xbf16>
    %c0_24 = arith.constant 0 : index
    %c0_25 = arith.constant 0 : index
    %37 = vector.load %arg10[%c0_24, %c0_25] : memref<128x128xbf16, #tpu.memory_space<vmem>>, vector<128x128xbf16>
    %cst_26 = arith.constant dense<0.000000e+00> : vector<16x128xf32>
    %38 = tpu.matmul %36, %37, %cst_26 {dimension_numbers = #tpu.dot_dimension_numbers<[1], [0], [0], [1], [0, 0, 1, 1], [], []>} : vector<16x128xbf16>, vector<128x128xbf16>, vector<16x128xf32> -> vector<16x128xf32>
    %c0_27 = arith.constant 0 : index
    %c0_28 = arith.constant 0 : index
    %39 = vector.load %arg11[%c0_27, %c0_28] : memref<1x128xf32, #tpu.memory_space<vmem>>, vector<1x128xf32>
    %40 = vector.broadcast %39 : vector<1x128xf32> to vector<16x128xf32>
    %41 = arith.addf %38, %40 : vector<16x128xf32>
    %c0_29 = arith.constant 0 : index
    %c0_30 = arith.constant 0 : index
    %42 = vector.load %arg12[%c0_29, %c0_30] : memref<16x128xf32, #tpu.memory_space<vmem>>, vector<16x128xf32>
    tpu.vector_store %arg12[%c0_29, %c0_30], %41 {strides = array<i32>} : memref<16x128xf32, #tpu.memory_space<vmem>>, vector<16x128xf32>,
    return
  }
  func.func @transform_0(%arg0: i32) -> (i32, i32) {
    %c0_i32 = arith.constant 0 : i32
    %c0_i32_0 = arith.constant 0 : i32
    return %arg0, %c0_i32 : i32, i32
  }
  func.func @transform_1(%arg0: i32) -> (i32, i32) {
    %c0_i32 = arith.constant 0 : i32
    %c0_i32_0 = arith.constant 0 : i32
    %c0_i32_1 = arith.constant 0 : i32
    return %c0_i32, %c0_i32_0 : i32, i32
  }
  func.func @transform_2(%arg0: i32) -> (i32, i32) {
    %c0_i32 = arith.constant 0 : i32
    %c0_i32_0 = arith.constant 0 : i32
    %c0_i32_1 = arith.constant 0 : i32
    return %c0_i32, %c0_i32_0 : i32, i32
  }
  func.func @transform_3(%arg0: i32) -> (i32, i32) {
    %c0_i32 = arith.constant 0 : i32
    %c0_i32_0 = arith.constant 0 : i32
    %c0_i32_1 = arith.constant 0 : i32
    return %c0_i32, %c0_i32_0 : i32, i32
  }
  func.func @transform_4(%arg0: i32) -> (i32, i32) {
    %c0_i32 = arith.constant 0 : i32
    %c0_i32_0 = arith.constant 0 : i32
    %c0_i32_1 = arith.constant 0 : i32
    return %c0_i32, %c0_i32_0 : i32, i32
  }
  func.func @transform_5(%arg0: i32) -> (i32, i32) {
    %c0_i32 = arith.constant 0 : i32
    %c0_i32_0 = arith.constant 0 : i32
    %c0_i32_1 = arith.constant 0 : i32
    return %c0_i32, %c0_i32_0 : i32, i32
  }
  func.func @transform_6(%arg0: i32) -> (i32, i32) {
    %c0_i32 = arith.constant 0 : i32
    %c0_i32_0 = arith.constant 0 : i32
    %c0_i32_1 = arith.constant 0 : i32
    return %c0_i32, %c0_i32_0 : i32, i32
  }
  func.func @transform_7(%arg0: i32) -> (i32, i32) {
    %c0_i32 = arith.constant 0 : i32
    %c0_i32_0 = arith.constant 0 : i32
    %c0_i32_1 = arith.constant 0 : i32
    return %c0_i32, %c0_i32_0 : i32, i32
  }
  func.func @transform_8(%arg0: i32) -> (i32, i32) {
    %c0_i32 = arith.constant 0 : i32
    %c0_i32_0 = arith.constant 0 : i32
    %c0_i32_1 = arith.constant 0 : i32
    return %c0_i32, %c0_i32_0 : i32, i32
  }
  func.func @transform_9(%arg0: i32) -> (i32, i32) {
    %c0_i32 = arith.constant 0 : i32
    %c0_i32_0 = arith.constant 0 : i32
    %c0_i32_1 = arith.constant 0 : i32
    return %c0_i32, %c0_i32_0 : i32, i32
  }
  func.func @transform_10(%arg0: i32) -> (i32, i32) {
    %c0_i32 = arith.constant 0 : i32
    %c0_i32_0 = arith.constant 0 : i32
    %c0_i32_1 = arith.constant 0 : i32
    return %c0_i32, %c0_i32_0 : i32, i32
  }
  func.func @transform_11(%arg0: i32) -> (i32, i32) {
    %c0_i32 = arith.constant 0 : i32
    %c0_i32_0 = arith.constant 0 : i32
    return %arg0, %c0_i32 : i32, i32
  }
}

module attributes {stable_mosaic.version = 11 : i64} {
  func.func @_gen_mlp_kernel(%arg0: i32, %arg1: memref<16x128xbf16, #tpu.memory_space<vmem>>, %arg2: memref<128x128xbf16, #tpu.memory_space<vmem>>, %arg3: memref<1x128xf32, #tpu.memory_space<vmem>>, %arg4: memref<128x128xbf16, #tpu.memory_space<vmem>>, %arg5: memref<1x128xf32, #tpu.memory_space<vmem>>, %arg6: memref<128x128xbf16, #tpu.memory_space<vmem>>, %arg7: memref<1x128xf32, #tpu.memory_space<vmem>>, %arg8: memref<128x128xbf16, #tpu.memory_space<vmem>>, %arg9: memref<1x128xf32, #tpu.memory_space<vmem>>, %arg10: memref<128x128xbf16, #tpu.memory_space<vmem>>, %arg11: memref<1x128xf32, #tpu.memory_space<vmem>>, %arg12: memref<16x128xf32, #tpu.memory_space<vmem>>) attributes {dimension_semantics = [#tpu.dimension_semantics<parallel>], iteration_bounds = array<i64: 1>, scalar_prefetch = 0 : i64, scratch_operands = 0 : i64, tpu.core_type = #tpu.core_type<tc>, window_params = [{transform_indices = @transform_0, window_bounds = array<i64: 16, 128>}, {pipeline_mode = #tpu.pipeline_mode<synchronous>, transform_indices = @transform_1, window_bounds = array<i64: 128, 128>}, {pipeline_mode = #tpu.pipeline_mode<synchronous>, transform_indices = @transform_2, window_bounds = array<i64: 1, 128>}, {pipeline_mode = #tpu.pipeline_mode<synchronous>, transform_indices = @transform_3, window_bounds = array<i64: 128, 128>}, {pipeline_mode = #tpu.pipeline_mode<synchronous>, transform_indices = @transform_4, window_bounds = array<i64: 1, 128>}, {pipeline_mode = #tpu.pipeline_mode<synchronous>, transform_indices = @transform_5, window_bounds = array<i64: 128, 128>}, {pipeline_mode = #tpu.pipeline_mode<synchronous>, transform_indices = @transform_6, window_bounds = array<i64: 1, 128>}, {pipeline_mode = #tpu.pipeline_mode<synchronous>, transform_indices = @transform_7, window_bounds = array<i64: 128, 128>}, {pipeline_mode = #tpu.pipeline_mode<synchronous>, transform_indices = @transform_8, window_bounds = array<i64: 1, 128>}, {pipeline_mode = #tpu.pipeline_mode<synchronous>, transform_indices = @transform_9, window_bounds = array<i64: 128, 128>}, {pipeline_mode = #tpu.pipeline_mode<synchronous>, transform_indices = @transform_10, window_bounds = array<i64: 1, 128>}, {transform_indices = @transform_11, window_bounds = array<i64: 16, 128>}]} {
    %c0 = arith.constant 0 : index
    %c0_0 = arith.constant 0 : index
    %0 = vector.load %arg1[%c0, %c0_0] : memref<16x128xbf16, #tpu.memory_space<vmem>>, vector<16x128xbf16>
    %c0_1 = arith.constant 0 : index
    %c0_2 = arith.constant 0 : index
    %1 = vector.load %arg2[%c0_1, %c0_2] : memref<128x128xbf16, #tpu.memory_space<vmem>>, vector<128x128xbf16>
    %cst = arith.constant dense<0.000000e+00> : vector<16x128xf32>
    %2 = tpu.matmul %0, %1, %cst {dimension_numbers = #tpu.dot_dimension_numbers<[1], [0], [0], [1], [0, 0, 1, 1], [], []>} : vector<16x128xbf16>, vector<128x128xbf16>, vector<16x128xf32> -> vector<16x128xf32>
    %c0_3 = arith.constant 0 : index
    %c0_4 = arith.constant 0 : index
    %3 = vector.load %arg3[%c0_3, %c0_4] : memref<1x128xf32, #tpu.memory_space<vmem>>, vector<1x128xf32>
    %4 = vector.broadcast %3 : vector<1x128xf32> to vector<16x128xf32>
    %5 = arith.addf %2, %4 : vector<16x128xf32>
    %cst_5 = arith.constant 0.00999999977 : f32
    %6 = vector.broadcast %cst_5 : f32 to vector<16x128xf32>
    %7 = arith.mulf %6, %5 : vector<16x128xf32>
    %8 = arith.maximumf %5, %7 : vector<16x128xf32>
    %9 = arith.truncf %8 : vector<16x128xf32> to vector<16x128xbf16>
    %c0_6 = arith.constant 0 : index
    %c0_7 = arith.constant 0 : index
    %10 = vector.load %arg4[%c0_6, %c0_7] : memref<128x128xbf16, #tpu.memory_space<vmem>>, vector<128x128xbf16>
    %cst_8 = arith.constant dense<0.000000e+00> : vector<16x128xf32>
    %11 = tpu.matmul %9, %10, %cst_8 {dimension_numbers = #tpu.dot_dimension_numbers<[1], [0], [0], [1], [0, 0, 1, 1], [], []>} : vector<16x128xbf16>, vector<128x128xbf16>, vector<16x128xf32> -> vector<16x128xf32>
    %c0_9 = arith.constant 0 : index
    %c0_10 = arith.constant 0 : index
    %12 = vector.load %arg5[%c0_9, %c0_10] : memref<1x128xf32, #tpu.memory_space<vmem>>, vector<1x128xf32>
    %13 = vector.broadcast %12 : vector<1x128xf32> to vector<16x128xf32>
    %14 = arith.addf %11, %13 : vector<16x128xf32>
    %cst_11 = arith.constant 0.00999999977 : f32
    %15 = vector.broadcast %cst_11 : f32 to vector<16x128xf32>
    %16 = arith.mulf %15, %14 : vector<16x128xf32>
    %17 = arith.maximumf %14, %16 : vector<16x128xf32>
    %18 = arith.truncf %17 : vector<16x128xf32> to vector<16x128xbf16>
    %c0_12 = arith.constant 0 : index
    %c0_13 = arith.constant 0 : index
    %19 = vector.load %arg6[%c0_12, %c0_13] : memref<128x128xbf16, #tpu.memory_space<vmem>>, vector<128x128xbf16>
    %cst_14 = arith.constant dense<0.000000e+00> : vector<16x128xf32>
    %20 = tpu.matmul %18, %19, %cst_14 {dimension_numbers = #tpu.dot_dimension_numbers<[1], [0], [0], [1], [0, 0, 1, 1], [], []>} : vector<16x128xbf16>, vector<128x128xbf16>, vector<16x128xf32> -> vector<16x128xf32>
    %c0_15 = arith.constant 0 : index
    %c0_16 = arith.constant 0 : index
    %21 = vector.load %arg7[%c0_15, %c0_16] : memref<1x128xf32, #tpu.memory_space<vmem>>, vector<1x128xf32>
    %22 = vector.broadcast %21 : vector<1x128xf32> to vector<16x128xf32>
    %23 = arith.addf %20, %22 : vector<16x128xf32>
    %cst_17 = arith.constant 0.00999999977 : f32
    %24 = vector.broadcast %cst_17 : f32 to vector<16x128xf32>
    %25 = arith.mulf %24, %23 : vector<16x128xf32>
    %26 = arith.maximumf %23, %25 : vector<16x128xf32>
    %27 = arith.truncf %26 : vector<16x128xf32> to vector<16x128xbf16>
    %c0_18 = arith.constant 0 : index
    %c0_19 = arith.constant 0 : index
    %28 = vector.load %arg8[%c0_18, %c0_19] : memref<128x128xbf16, #tpu.memory_space<vmem>>, vector<128x128xbf16>
    %cst_20 = arith.constant dense<0.000000e+00> : vector<16x128xf32>
    %29 = tpu.matmul %27, %28, %cst_20 {dimension_numbers = #tpu.dot_dimension_numbers<[1], [0], [0], [1], [0, 0, 1, 1], [], []>} : vector<16x128xbf16>, vector<128x128xbf16>, vector<16x128xf32> -> vector<16x128xf32>
    %c0_21 = arith.constant 0 : index
    %c0_22 = arith.constant 0 : index
    %30 = vector.load %arg9[%c0_21, %c0_22] : memref<1x128xf32, #tpu.memory_space<vmem>>, vector<1x128xf32>
    %31 = vector.broadcast %30 : vector<1x128xf32> to vector<16x128xf32>
    %32 = arith.addf %29, %31 : vector<16x128xf32>
    %cst_23 = arith.constant 0.00999999977 : f32
    %33 = vector.broadcast %cst_23 : f32 to vector<16x128xf32>
    %34 = arith.mulf %33, %32 : vector<16x128xf32>
    %35 = arith.maximumf %32, %34 : vector<16x128xf32>
    %36 = arith.truncf %35 : vector<16x128xf32> to vector<16x128xbf16>
    %c0_24 = arith.constant 0 : index
    %c0_25 = arith.constant 0 : index
    %37 = vector.load %arg10[%c0_24, %c0_25] : memref<128x128xbf16, #tpu.memory_space<vmem>>, vector<128x128xbf16>
    %cst_26 = arith.constant dense<0.000000e+00> : vector<16x128xf32>
    %38 = tpu.matmul %36, %37, %cst_26 {dimension_numbers = #tpu.dot_dimension_numbers<[1], [0], [0], [1], [0, 0, 1, 1], [], []>} : vector<16x128xbf16>, vector<128x128xbf16>, vector<16x128xf32> -> vector<16x128xf32>
    %c0_27 = arith.constant 0 : index
    %c0_28 = arith.constant 0 : index
    %39 = vector.load %arg11[%c0_27, %c0_28] : memref<1x128xf32, #tpu.memory_space<vmem>>, vector<1x128xf32>
    %40 = vector.broadcast %39 : vector<1x128xf32> to vector<16x128xf32>
    %41 = arith.addf %38, %40 : vector<16x128xf32>
    %c0_29 = arith.constant 0 : index
    %c0_30 = arith.constant 0 : index
    %42 = vector.load %arg12[%c0_29, %c0_30] : memref<16x128xf32, #tpu.memory_space<vmem>>, vector<16x128xf32>
    tpu.vector_store %arg12[%c0_29, %c0_30], %41 {strides = array<i32>} : memref<16x128xf32, #tpu.memory_space<vmem>>, vector<16x128xf32>,
    return
  }
  func.func @transform_0(%arg0: i32) -> (i32, i32) {
    %c0_i32 = arith.constant 0 : i32
    %c0_i32_0 = arith.constant 0 : i32
    return %arg0, %c0_i32 : i32, i32
  }
  func.func @transform_1(%arg0: i32) -> (i32, i32) {
    %c0_i32 = arith.constant 0 : i32
    %c0_i32_0 = arith.constant 0 : i32
    %c0_i32_1 = arith.constant 0 : i32
    return %c0_i32, %c0_i32_0 : i32, i32
  }
  func.func @transform_2(%arg0: i32) -> (i32, i32) {
    %c0_i32 = arith.constant 0 : i32
    %c0_i32_0 = arith.constant 0 : i32
    %c0_i32_1 = arith.constant 0 : i32
    return %c0_i32, %c0_i32_0 : i32, i32
  }
  func.func @transform_3(%arg0: i32) -> (i32, i32) {
    %c0_i32 = arith.constant 0 : i32
    %c0_i32_0 = arith.constant 0 : i32
    %c0_i32_1 = arith.constant 0 : i32
    return %c0_i32, %c0_i32_0 : i32, i32
  }
  func.func @transform_4(%arg0: i32) -> (i32, i32) {
    %c0_i32 = arith.constant 0 : i32
    %c0_i32_0 = arith.constant 0 : i32
    %c0_i32_1 = arith.constant 0 : i32
    return %c0_i32, %c0_i32_0 : i32, i32
  }
  func.func @transform_5(%arg0: i32) -> (i32, i32) {
    %c0_i32 = arith.constant 0 : i32
    %c0_i32_0 = arith.constant 0 : i32
    %c0_i32_1 = arith.constant 0 : i32
    return %c0_i32, %c0_i32_0 : i32, i32
  }
  func.func @transform_6(%arg0: i32) -> (i32, i32) {
    %c0_i32 = arith.constant 0 : i32
    %c0_i32_0 = arith.constant 0 : i32
    %c0_i32_1 = arith.constant 0 : i32
    return %c0_i32, %c0_i32_0 : i32, i32
  }
  func.func @transform_7(%arg0: i32) -> (i32, i32) {
    %c0_i32 = arith.constant 0 : i32
    %c0_i32_0 = arith.constant 0 : i32
    %c0_i32_1 = arith.constant 0 : i32
    return %c0_i32, %c0_i32_0 : i32, i32
  }
  func.func @transform_8(%arg0: i32) -> (i32, i32) {
    %c0_i32 = arith.constant 0 : i32
    %c0_i32_0 = arith.constant 0 : i32
    %c0_i32_1 = arith.constant 0 : i32
    return %c0_i32, %c0_i32_0 : i32, i32
  }
  func.func @transform_9(%arg0: i32) -> (i32, i32) {
    %c0_i32 = arith.constant 0 : i32
    %c0_i32_0 = arith.constant 0 : i32
    %c0_i32_1 = arith.constant 0 : i32
    return %c0_i32, %c0_i32_0 : i32, i32
  }
  func.func @transform_10(%arg0: i32) -> (i32, i32) {
    %c0_i32 = arith.constant 0 : i32
    %c0_i32_0 = arith.constant 0 : i32
    %c0_i32_1 = arith.constant 0 : i32
    return %c0_i32, %c0_i32_0 : i32, i32
  }
  func.func @transform_11(%arg0: i32) -> (i32, i32) {
    %c0_i32 = arith.constant 0 : i32
    %c0_i32_0 = arith.constant 0 : i32
    return %arg0, %c0_i32 : i32, i32
  }
}

</mosaic_0001>

<llo_original>
// kernel: tpu_custom_call.1
$region0: #{tpu_custom_call.1}
  #allocation0 [shape = 'u32[]', space=smem, size = 0x4, offset = 0x4, fixed_abs, tag = 'smem constant byte address 0x4 - core index']
  #allocation1 [shape = 'u32[144,128]{1,0:T(1,128)}', space=vmem, size = 0x12000, scoped, tag = 'internal scratch']
  %s0 = inlined_call_operand.hbm [shape: bf16[16,128], index: 0, kind: input, shape index: {}]
  %s1 = inlined_call_operand.hbm [shape: bf16[128,128], index: 1, kind: input, shape index: {}]
  %s2 = inlined_call_operand.vmem [shape: f32[1,128], index: 2, kind: input, shape index: {}]
  %s3 = inlined_call_operand.hbm [shape: bf16[128,128], index: 3, kind: input, shape index: {}]
  %s4 = inlined_call_operand.vmem [shape: f32[1,128], index: 4, kind: input, shape index: {}]
  %s5 = inlined_call_operand.hbm [shape: bf16[128,128], index: 5, kind: input, shape index: {}]
  %s6 = inlined_call_operand.vmem [shape: f32[1,128], index: 6, kind: input, shape index: {}]
  %s7 = inlined_call_operand.hbm [shape: bf16[128,128], index: 7, kind: input, shape index: {}]
  %s8 = inlined_call_operand.vmem [shape: f32[1,128], index: 8, kind: input, shape index: {}]
  %s9 = inlined_call_operand.hbm [shape: bf16[128,128], index: 9, kind: input, shape index: {}]
  %s10 = inlined_call_operand.vmem [shape: f32[1,128], index: 10, kind: input, shape index: {}]
  %s11 = inlined_call_operand.hbm [shape: f32[16,128], index: 11, kind: output, shape index: {}]
  %s12 = sld [smem:[#allocation0]]
  $region78: #{tpu_custom_call.1} parent=0
    _
  %s14 = ssub.s32 1, %s12
  %s15 = scalar_select 0, %s14, %s12
  $region1: #{tpu_custom_call.1} parent=0
    #allocation2 [shape = 'u8[4096]{0}', space=vmem, size = 0x1000, scoped, tag = 'input window, operand 0, single buffered']
    #allocation3 [shape = 's32[1]{0}', space=sflag, size = 0x4, scoped, tag = 'scoped memory for tpu_custom_call.1']
    #allocation4 [shape = 's32[1]{0}', space=sflag, size = 0x4, scoped, tag = 'scoped memory for tpu_custom_call.1']
    #allocation5 [shape = 'u8[32768]{0}', space=vmem, size = 0x8000, scoped, tag = 'input window, operand 1, single buffered']
    #allocation6 [shape = 's32[1]{0}', space=sflag, size = 0x4, scoped, tag = 'scoped memory for tpu_custom_call.1']
    #allocation7 [shape = 'u8[32768]{0}', space=vmem, size = 0x8000, scoped, tag = 'input window, operand 3, single buffered']
    #allocation8 [shape = 'u8[32768]{0}', space=vmem, size = 0x8000, scoped, tag = 'input window, operand 5, single buffered']
    #allocation9 [shape = 's32[1]{0}', space=sflag, size = 0x4, scoped, tag = 'scoped memory for tpu_custom_call.1']
    #allocation10 [shape = 'u8[32768]{0}', space=vmem, size = 0x8000, scoped, tag = 'input window, operand 7, single buffered']
    #allocation11 [shape = 'u8[32768]{0}', space=vmem, size = 0x8000, scoped, tag = 'input window, operand 9, single buffered']
    #allocation12 [shape = 's32[1]{0}', space=sflag, size = 0x4, scoped, tag = 'scoped memory for tpu_custom_call.1']
    #allocation13 [shape = 'u8[8192]{0}', space=vmem, size = 0x2000, scoped, tag = 'output window, operand 0, single buffered']
    %16 = vsyncpa [#allocation3], 0
    %17 = vsyncpa [#allocation6], 0
    %18 = vsyncpa [#allocation9], 0
    %19 = vsyncpa [#allocation12], 0
    %20 = vsyncpa [#allocation4], 0
    // Predicated region
    $region2: #{tpu_custom_call.1} parent=1 // pred_check
      _
    $region3: #{tpu_custom_call.1} parent=1 // pred_check_branch
      %22 = sbr.rel (0) target = $region5
    $region4: #{tpu_custom_call.1} parent=1 // pred_region
      %s24 = ssub.s32 128, 128
      %25 = vsyncadd [#allocation3], %s24
      %s26 = sshll.u32 [#allocation2], 4
      %s27 = int_to_ptr.vmem [resolvable:$true] %s26
      %32 = dma.hbm_to_vmem [thread:$0]  %s0, 128, %s27, [#allocation3], 64, 64, 4
    $region5: #{tpu_custom_call.1} parent=1 // pred_fallthru
      _
    // Predicated region
    $region6: #{tpu_custom_call.1} parent=1 // pred_check
      _
    $region7: #{tpu_custom_call.1} parent=1 // pred_check_branch
      %34 = sbr.rel (0) target = $region9
    $region8: #{tpu_custom_call.1} parent=1 // pred_region
      %s36 = ssub.s32 1024, 1024
      %37 = vsyncadd [#allocation6], %s36
      %s38 = sshll.u32 [#allocation5], 4
      %s39 = int_to_ptr.vmem [resolvable:$true] %s38
      %44 = dma.hbm_to_vmem [thread:$0]  %s1, 1024, %s39, [#allocation6], 64, 64, 4
    $region9: #{tpu_custom_call.1} parent=1 // pred_fallthru
      _
    // Predicated region
    $region10: #{tpu_custom_call.1} parent=1 // pred_check
      _
    $region11: #{tpu_custom_call.1} parent=1 // pred_check_branch
      %46 = sbr.rel (0) target = $region13
    $region12: #{tpu_custom_call.1} parent=1 // pred_region
      _
    $region13: #{tpu_custom_call.1} parent=1 // pred_fallthru
      _
    // Predicated region
    $region14: #{tpu_custom_call.1} parent=1 // pred_check
      _
    $region15: #{tpu_custom_call.1} parent=1 // pred_check_branch
      %48 = sbr.rel (0) target = $region17
    $region16: #{tpu_custom_call.1} parent=1 // pred_region
      %s50 = ssub.s32 1024, 1024
      %51 = vsyncadd [#allocation6], %s50
      %s52 = sshll.u32 [#allocation7], 4
      %s53 = int_to_ptr.vmem [resolvable:$true] %s52
      %58 = dma.hbm_to_vmem [thread:$0]  %s3, 1024, %s53, [#allocation6], 64, 64, 4
    $region17: #{tpu_custom_call.1} parent=1 // pred_fallthru
      _
    // Predicated region
    $region18: #{tpu_custom_call.1} parent=1 // pred_check
      _
    $region19: #{tpu_custom_call.1} parent=1 // pred_check_branch
      %60 = sbr.rel (0) target = $region21
    $region20: #{tpu_custom_call.1} parent=1 // pred_region
      _
    $region21: #{tpu_custom_call.1} parent=1 // pred_fallthru
      _
    // Predicated region
    $region22: #{tpu_custom_call.1} parent=1 // pred_check
      _
    $region23: #{tpu_custom_call.1} parent=1 // pred_check_branch
      %62 = sbr.rel (0) target = $region25
    $region24: #{tpu_custom_call.1} parent=1 // pred_region
      %s64 = ssub.s32 1024, 1024
      %65 = vsyncadd [#allocation9], %s64
      %s66 = sshll.u32 [#allocation8], 4
      %s67 = int_to_ptr.vmem [resolvable:$true] %s66
      %72 = dma.hbm_to_vmem [thread:$0]  %s5, 1024, %s67, [#allocation9], 64, 64, 4
    $region25: #{tpu_custom_call.1} parent=1 // pred_fallthru
      _
    // Predicated region
    $region26: #{tpu_custom_call.1} parent=1 // pred_check
      _
    $region27: #{tpu_custom_call.1} parent=1 // pred_check_branch
      %74 = sbr.rel (0) target = $region29
    $region28: #{tpu_custom_call.1} parent=1 // pred_region
      _
    $region29: #{tpu_custom_call.1} parent=1 // pred_fallthru
      _
    // Predicated region
    $region30: #{tpu_custom_call.1} parent=1 // pred_check
      _
    $region31: #{tpu_custom_call.1} parent=1 // pred_check_branch
      %76 = sbr.rel (0) target = $region33
    $region32: #{tpu_custom_call.1} parent=1 // pred_region
      %s78 = ssub.s32 1024, 1024
      %79 = vsyncadd [#allocation9], %s78
      %s80 = sshll.u32 [#allocation10], 4
      %s81 = int_to_ptr.vmem [resolvable:$true] %s80
      %86 = dma.hbm_to_vmem [thread:$0]  %s7, 1024, %s81, [#allocation9], 64, 64, 4
    $region33: #{tpu_custom_call.1} parent=1 // pred_fallthru
      _
    // Predicated region
    $region34: #{tpu_custom_call.1} parent=1 // pred_check
      _
    $region35: #{tpu_custom_call.1} parent=1 // pred_check_branch
      %88 = sbr.rel (0) target = $region37
    $region36: #{tpu_custom_call.1} parent=1 // pred_region
      _
    $region37: #{tpu_custom_call.1} parent=1 // pred_fallthru
      _
    // Predicated region
    $region38: #{tpu_custom_call.1} parent=1 // pred_check
      _
    $region39: #{tpu_custom_call.1} parent=1 // pred_check_branch
      %90 = sbr.rel (0) target = $region41
    $region40: #{tpu_custom_call.1} parent=1 // pred_region
      %s92 = ssub.s32 1024, 1024
      %93 = vsyncadd [#allocation12], %s92
      %s94 = sshll.u32 [#allocation11], 4
      %s95 = int_to_ptr.vmem [resolvable:$true] %s94
      %100 = dma.hbm_to_vmem [thread:$0]  %s9, 1024, %s95, [#allocation12], 64, 64, 4
    $region41: #{tpu_custom_call.1} parent=1 // pred_fallthru
      _
    // Predicated region
    $region42: #{tpu_custom_call.1} parent=1 // pred_check
      _
    $region43: #{tpu_custom_call.1} parent=1 // pred_check_branch
      %102 = sbr.rel (0) target = $region45
    $region44: #{tpu_custom_call.1} parent=1 // pred_region
      _
    $region45: #{tpu_custom_call.1} parent=1 // pred_fallthru
      _
    // Predicated region
    $region46: #{tpu_custom_call.1} parent=1 // pred_check
      _
    $region47: #{tpu_custom_call.1} parent=1 // pred_check_branch
      %104 = sbr.rel (0) target = $region49
    $region48: #{tpu_custom_call.1} parent=1 // pred_region
      %105 = dma.done [#allocation3], 128
    $region49: #{tpu_custom_call.1} parent=1 // pred_fallthru
      _
    // Predicated region
    $region50: #{tpu_custom_call.1} parent=1 // pred_check
      _
    $region51: #{tpu_custom_call.1} parent=1 // pred_check_branch
      %107 = sbr.rel (0) target = $region53
    $region52: #{tpu_custom_call.1} parent=1 // pred_region
      %108 = dma.done [#allocation6], 1024
    $region53: #{tpu_custom_call.1} parent=1 // pred_fallthru
      _
    // Predicated region
    $region54: #{tpu_custom_call.1} parent=1 // pred_check
      _
    $region55: #{tpu_custom_call.1} parent=1 // pred_check_branch
      %110 = sbr.rel (0) target = $region57
    $region56: #{tpu_custom_call.1} parent=1 // pred_region
      %111 = dma.done [#allocation6], 1024
    $region57: #{tpu_custom_call.1} parent=1 // pred_fallthru
      _
    // Predicated region
    $region58: #{tpu_custom_call.1} parent=1 // pred_check
      _
    $region59: #{tpu_custom_call.1} parent=1 // pred_check_branch
      %113 = sbr.rel (0) target = $region61
    $region60: #{tpu_custom_call.1} parent=1 // pred_region
      %114 = dma.done [#allocation9], 1024
    $region61: #{tpu_custom_call.1} parent=1 // pred_fallthru
      _
    // Predicated region
    $region62: #{tpu_custom_call.1} parent=1 // pred_check
      _
    $region63: #{tpu_custom_call.1} parent=1 // pred_check_branch
      %116 = sbr.rel (0) target = $region65
    $region64: #{tpu_custom_call.1} parent=1 // pred_region
      %117 = dma.done [#allocation9], 1024
    $region65: #{tpu_custom_call.1} parent=1 // pred_fallthru
      _
    // Predicated region
    $region66: #{tpu_custom_call.1} parent=1 // pred_check
      _
    $region67: #{tpu_custom_call.1} parent=1 // pred_check_branch
      %119 = sbr.rel (0) target = $region69
    $region68: #{tpu_custom_call.1} parent=1 // pred_region
      %120 = dma.done [#allocation12], 1024
    $region69: #{tpu_custom_call.1} parent=1 // pred_fallthru
      _
    %v122 = vld [vmem:[#allocation2] sm:$0xf]
    %v123 = vld [vmem:[#allocation2 + $0x4] sm:$0xf]
    %v124 = vld [vmem:[#allocation5] sm:$0xf]
    %v125 = vld [vmem:[#allocation5 + $0x4] sm:$0xf]
    %v126 = vld [vmem:[#allocation5 + $0x8] sm:$0xf]
    %v127 = vld [vmem:[#allocation5 + $0xc] sm:$0xf]
    %v128 = vld [vmem:[#allocation5 + $0x10] sm:$0xf]
    %v129 = vld [vmem:[#allocation5 + $0x14] sm:$0xf]
    %v130 = vld [vmem:[#allocation5 + $0x18] sm:$0xf]
    %v131 = vld [vmem:[#allocation5 + $0x1c] sm:$0xf]
    %v132 = vld [vmem:[#allocation5 + $0x20] sm:$0xf]
    %v133 = vld [vmem:[#allocation5 + $0x24] sm:$0xf]
    %v134 = vld [vmem:[#allocation5 + $0x28] sm:$0xf]
    %v135 = vld [vmem:[#allocation5 + $0x2c] sm:$0xf]
    %v136 = vld [vmem:[#allocation5 + $0x30] sm:$0xf]
    %v137 = vld [vmem:[#allocation5 + $0x34] sm:$0xf]
    %v138 = vld [vmem:[#allocation5 + $0x38] sm:$0xf]
    %v139 = vld [vmem:[#allocation5 + $0x3c] sm:$0xf]
    %v140 = vld [vmem:[%s2] sm:$0x1]
    %v142 = vlaneseq
    %v143 = vshrl.u32 %v142, 7
    %v144 = vsub.s32 0, %v143
    %v145 = vrot.slane %v140, %v144
    %v149 = vunpack.c.l.b16 %v122
    %v150 = vunpack.c.l.b16 %v123
    %v151 = vpack.c.b16 %v150, %v149
    %v169 = vunpack.c.l.b16 %v124
    %v170 = vunpack.c.l.b16 %v125
    %v171 = vunpack.c.l.b16 %v126
    %v172 = vunpack.c.l.b16 %v127
    %v173 = vunpack.c.l.b16 %v128
    %v174 = vunpack.c.l.b16 %v129
    %v175 = vunpack.c.l.b16 %v130
    %v176 = vunpack.c.l.b16 %v131
    %v177 = vunpack.c.l.b16 %v132
    %v178 = vunpack.c.l.b16 %v133
    %v179 = vunpack.c.l.b16 %v134
    %v180 = vunpack.c.l.b16 %v135
    %v181 = vunpack.c.l.b16 %v136
    %v182 = vunpack.c.l.b16 %v137
    %v183 = vunpack.c.l.b16 %v138
    %v184 = vunpack.c.l.b16 %v139
    %v185 = vpack.c.b16 %v170, %v169
    %v186 = vpack.c.b16 %v172, %v171
    %v187 = vpack.c.b16 %v174, %v173
    %v188 = vpack.c.b16 %v176, %v175
    %v189 = vpack.c.b16 %v178, %v177
    %v190 = vpack.c.b16 %v180, %v179
    %v191 = vpack.c.b16 %v182, %v181
    %v192 = vpack.c.b16 %v184, %v183
    %201 = vmatprep.subr.bf16.mxu0 0
    %202 = vmatpush1.bf16.msra.mxu0 %v185
    %203 = vmatprep.subr.bf16.mxu0 0
    %204 = vmatpush1.bf16.msra.mxu0 %v186
    %205 = vmatprep.subr.bf16.mxu0 0
    %206 = vmatpush1.bf16.msra.mxu0 %v187
    %207 = vmatprep.subr.bf16.mxu0 0
    %208 = vmatpush1.bf16.msra.mxu0 %v188
    %209 = vmatprep.subr.bf16.mxu0 0
    %210 = vmatpush1.bf16.msra.mxu0 %v189
    %211 = vmatprep.subr.bf16.mxu0 0
    %212 = vmatpush1.bf16.msra.mxu0 %v190
    %213 = vmatprep.subr.bf16.mxu0 0
    %214 = vmatpush1.bf16.msra.mxu0 %v191
    %215 = vmatprep.subr.bf16.mxu0 0
    %216 = vmatpush1.bf16.msra.mxu0 %v192
    %217 = vmatprep.subr.bf16.mxu0 0
    %218 = vmatpush1.bf16.msra.mxu0 0
    %219 = vmatprep.subr.bf16.mxu0 0
    %220 = vmatpush1.bf16.msra.mxu0 0
    %221 = vmatprep.subr.bf16.mxu0 0
    %222 = vmatpush1.bf16.msra.mxu0 0
    %223 = vmatprep.subr.bf16.mxu0 0
    %224 = vmatpush1.bf16.msra.mxu0 0
    %225 = vmatprep.subr.bf16.mxu0 0
    %226 = vmatpush1.bf16.msra.mxu0 0
    %227 = vmatprep.subr.bf16.mxu0 0
    %228 = vmatpush1.bf16.msra.mxu0 0
    %229 = vmatprep.subr.bf16.mxu0 0
    %230 = vmatpush1.bf16.msra.mxu0 0
    %231 = vmatprep.subr.bf16.mxu0 0
    %232 = vmatpush1.bf16.msra.mxu0 0
    %233 = vmatprep.mubr.bf16.mxu0 0
    %234 = vmatmul.mubr.bf16.gmra.mrb[0].mxu0 %v151
    %v235 = vpop.f32.mrb[0].mxu0
    %v236 = vadd.f32 %v145, %v235
    %v237 = vpop.f32.mrb[0].mxu0
    %v238 = vpop.f32.mrb[0].mxu0
    %v239 = vadd.f32 %v145, %v238
    %v240 = vpop.f32.mrb[0].mxu0
    %241 = vdwg.mxu0
    %v242 = vmul.f32 %v236, 0.01
    %v243 = vmul.f32 %v239, 0.01
    %v244 = vmax.f32 %v236, %v242
    %v245 = vmax.f32 %v239, %v243
    %v246 = vpack.c.bf16 %v245, %v244
    %v247 = vld [vmem:[#allocation7] sm:$0xf]
    %v248 = vld [vmem:[#allocation7 + $0x4] sm:$0xf]
    %v249 = vld [vmem:[#allocation7 + $0x8] sm:$0xf]
    %v250 = vld [vmem:[#allocation7 + $0xc] sm:$0xf]
    %v251 = vld [vmem:[#allocation7 + $0x10] sm:$0xf]
    %v252 = vld [vmem:[#allocation7 + $0x14] sm:$0xf]
    %v253 = vld [vmem:[#allocation7 + $0x18] sm:$0xf]
    %v254 = vld [vmem:[#allocation7 + $0x1c] sm:$0xf]
    %v255 = vld [vmem:[#allocation7 + $0x20] sm:$0xf]
    %v256 = vld [vmem:[#allocation7 + $0x24] sm:$0xf]
    %v257 = vld [vmem:[#allocation7 + $0x28] sm:$0xf]
    %v258 = vld [vmem:[#allocation7 + $0x2c] sm:$0xf]
    %v259 = vld [vmem:[#allocation7 + $0x30] sm:$0xf]
    %v260 = vld [vmem:[#allocation7 + $0x34] sm:$0xf]
    %v261 = vld [vmem:[#allocation7 + $0x38] sm:$0xf]
    %v262 = vld [vmem:[#allocation7 + $0x3c] sm:$0xf]
    %v263 = vld [vmem:[%s4] sm:$0x1]
    %v265 = vlaneseq
    %v266 = vshrl.u32 %v265, 7
    %v267 = vsub.s32 0, %v266
    %v268 = vrot.slane %v263, %v267
    %v286 = vunpack.c.l.b16 %v247
    %v287 = vunpack.c.l.b16 %v248
    %v288 = vunpack.c.l.b16 %v249
    %v289 = vunpack.c.l.b16 %v250
    %v290 = vunpack.c.l.b16 %v251
    %v291 = vunpack.c.l.b16 %v252
    %v292 = vunpack.c.l.b16 %v253
    %v293 = vunpack.c.l.b16 %v254
    %v294 = vunpack.c.l.b16 %v255
    %v295 = vunpack.c.l.b16 %v256
    %v296 = vunpack.c.l.b16 %v257
    %v297 = vunpack.c.l.b16 %v258
    %v298 = vunpack.c.l.b16 %v259
    %v299 = vunpack.c.l.b16 %v260
    %v300 = vunpack.c.l.b16 %v261
    %v301 = vunpack.c.l.b16 %v262
    %v302 = vpack.c.b16 %v287, %v286
    %v303 = vpack.c.b16 %v289, %v288
    %v304 = vpack.c.b16 %v291, %v290
    %v305 = vpack.c.b16 %v293, %v292
    %v306 = vpack.c.b16 %v295, %v294
    %v307 = vpack.c.b16 %v297, %v296
    %v308 = vpack.c.b16 %v299, %v298
    %v309 = vpack.c.b16 %v301, %v300
    %318 = vmatprep.subr.bf16.mxu0 0
    %319 = vmatpush1.bf16.msra.mxu0 %v302
    %320 = vmatprep.subr.bf16.mxu0 0
    %321 = vmatpush1.bf16.msra.mxu0 %v303
    %322 = vmatprep.subr.bf16.mxu0 0
    %323 = vmatpush1.bf16.msra.mxu0 %v304
    %324 = vmatprep.subr.bf16.mxu0 0
    %325 = vmatpush1.bf16.msra.mxu0 %v305
    %326 = vmatprep.subr.bf16.mxu0 0
    %327 = vmatpush1.bf16.msra.mxu0 %v306
    %328 = vmatprep.subr.bf16.mxu0 0
    %329 = vmatpush1.bf16.msra.mxu0 %v307
    %330 = vmatprep.subr.bf16.mxu0 0
    %331 = vmatpush1.bf16.msra.mxu0 %v308
    %332 = vmatprep.subr.bf16.mxu0 0
    %333 = vmatpush1.bf16.msra.mxu0 %v309
    %334 = vmatprep.subr.bf16.mxu0 0
    %335 = vmatpush1.bf16.msra.mxu0 0
    %336 = vmatprep.subr.bf16.mxu0 0
    %337 = vmatpush1.bf16.msra.mxu0 0
    %338 = vmatprep.subr.bf16.mxu0 0
    %339 = vmatpush1.bf16.msra.mxu0 0
    %340 = vmatprep.subr.bf16.mxu0 0
    %341 = vmatpush1.bf16.msra.mxu0 0
    %342 = vmatprep.subr.bf16.mxu0 0
    %343 = vmatpush1.bf16.msra.mxu0 0
    %344 = vmatprep.subr.bf16.mxu0 0
    %345 = vmatpush1.bf16.msra.mxu0 0
    %346 = vmatprep.subr.bf16.mxu0 0
    %347 = vmatpush1.bf16.msra.mxu0 0
    %348 = vmatprep.subr.bf16.mxu0 0
    %349 = vmatpush1.bf16.msra.mxu0 0
    %350 = vmatprep.mubr.bf16.mxu0 0
    %351 = vmatmul.mubr.bf16.gmra.mrb[0].mxu0 %v246
    %v352 = vpop.f32.mrb[0].mxu0
    %v353 = vadd.f32 %v268, %v352
    %v354 = vpop.f32.mrb[0].mxu0
    %v355 = vpop.f32.mrb[0].mxu0
    %v356 = vadd.f32 %v268, %v355
    %v357 = vpop.f32.mrb[0].mxu0
    %358 = vdwg.mxu0
    %v359 = vmul.f32 %v353, 0.01
    %v360 = vmul.f32 %v356, 0.01
    %v361 = vmax.f32 %v353, %v359
    %v362 = vmax.f32 %v356, %v360
    %v363 = vpack.c.bf16 %v362, %v361
    %v364 = vld [vmem:[#allocation8] sm:$0xf]
    %v365 = vld [vmem:[#allocation8 + $0x4] sm:$0xf]
    %v366 = vld [vmem:[#allocation8 + $0x8] sm:$0xf]
    %v367 = vld [vmem:[#allocation8 + $0xc] sm:$0xf]
    %v368 = vld [vmem:[#allocation8 + $0x10] sm:$0xf]
    %v369 = vld [vmem:[#allocation8 + $0x14] sm:$0xf]
    %v370 = vld [vmem:[#allocation8 + $0x18] sm:$0xf]
    %v371 = vld [vmem:[#allocation8 + $0x1c] sm:$0xf]
    %v372 = vld [vmem:[#allocation8 + $0x20] sm:$0xf]
    %v373 = vld [vmem:[#allocation8 + $0x24] sm:$0xf]
    %v374 = vld [vmem:[#allocation8 + $0x28] sm:$0xf]
    %v375 = vld [vmem:[#allocation8 + $0x2c] sm:$0xf]
    %v376 = vld [vmem:[#allocation8 + $0x30] sm:$0xf]
    %v377 = vld [vmem:[#allocation8 + $0x34] sm:$0xf]
    %v378 = vld [vmem:[#allocation8 + $0x38] sm:$0xf]
    %v379 = vld [vmem:[#allocation8 + $0x3c] sm:$0xf]
    %v380 = vld [vmem:[%s6] sm:$0x1]
    %v382 = vlaneseq
    %v383 = vshrl.u32 %v382, 7
    %v384 = vsub.s32 0, %v383
    %v385 = vrot.slane %v380, %v384
    %v403 = vunpack.c.l.b16 %v364
    %v404 = vunpack.c.l.b16 %v365
    %v405 = vunpack.c.l.b16 %v366
    %v406 = vunpack.c.l.b16 %v367
    %v407 = vunpack.c.l.b16 %v368
    %v408 = vunpack.c.l.b16 %v369
    %v409 = vunpack.c.l.b16 %v370
    %v410 = vunpack.c.l.b16 %v371
    %v411 = vunpack.c.l.b16 %v372
    %v412 = vunpack.c.l.b16 %v373
    %v413 = vunpack.c.l.b16 %v374
    %v414 = vunpack.c.l.b16 %v375
    %v415 = vunpack.c.l.b16 %v376
    %v416 = vunpack.c.l.b16 %v377
    %v417 = vunpack.c.l.b16 %v378
    %v418 = vunpack.c.l.b16 %v379
    %v419 = vpack.c.b16 %v404, %v403
    %v420 = vpack.c.b16 %v406, %v405
    %v421 = vpack.c.b16 %v408, %v407
    %v422 = vpack.c.b16 %v410, %v409
    %v423 = vpack.c.b16 %v412, %v411
    %v424 = vpack.c.b16 %v414, %v413
    %v425 = vpack.c.b16 %v416, %v415
    %v426 = vpack.c.b16 %v418, %v417
    %435 = vmatprep.subr.bf16.mxu0 0
    %436 = vmatpush1.bf16.msra.mxu0 %v419
    %437 = vmatprep.subr.bf16.mxu0 0
    %438 = vmatpush1.bf16.msra.mxu0 %v420
    %439 = vmatprep.subr.bf16.mxu0 0
    %440 = vmatpush1.bf16.msra.mxu0 %v421
    %441 = vmatprep.subr.bf16.mxu0 0
    %442 = vmatpush1.bf16.msra.mxu0 %v422
    %443 = vmatprep.subr.bf16.mxu0 0
    %444 = vmatpush1.bf16.msra.mxu0 %v423
    %445 = vmatprep.subr.bf16.mxu0 0
    %446 = vmatpush1.bf16.msra.mxu0 %v424
    %447 = vmatprep.subr.bf16.mxu0 0
    %448 = vmatpush1.bf16.msra.mxu0 %v425
    %449 = vmatprep.subr.bf16.mxu0 0
    %450 = vmatpush1.bf16.msra.mxu0 %v426
    %451 = vmatprep.subr.bf16.mxu0 0
    %452 = vmatpush1.bf16.msra.mxu0 0
    %453 = vmatprep.subr.bf16.mxu0 0
    %454 = vmatpush1.bf16.msra.mxu0 0
    %455 = vmatprep.subr.bf16.mxu0 0
    %456 = vmatpush1.bf16.msra.mxu0 0
    %457 = vmatprep.subr.bf16.mxu0 0
    %458 = vmatpush1.bf16.msra.mxu0 0
    %459 = vmatprep.subr.bf16.mxu0 0
    %460 = vmatpush1.bf16.msra.mxu0 0
    %461 = vmatprep.subr.bf16.mxu0 0
    %462 = vmatpush1.bf16.msra.mxu0 0
    %463 = vmatprep.subr.bf16.mxu0 0
    %464 = vmatpush1.bf16.msra.mxu0 0
    %465 = vmatprep.subr.bf16.mxu0 0
    %466 = vmatpush1.bf16.msra.mxu0 0
    %467 = vmatprep.mubr.bf16.mxu0 0
    %468 = vmatmul.mubr.bf16.gmra.mrb[0].mxu0 %v363
    %v469 = vpop.f32.mrb[0].mxu0
    %v470 = vadd.f32 %v385, %v469
    %v471 = vpop.f32.mrb[0].mxu0
    %v472 = vpop.f32.mrb[0].mxu0
    %v473 = vadd.f32 %v385, %v472
    %v474 = vpop.f32.mrb[0].mxu0
    %475 = vdwg.mxu0
    %v476 = vmul.f32 %v470, 0.01
    %v477 = vmul.f32 %v473, 0.01
    %v478 = vmax.f32 %v470, %v476
    %v479 = vmax.f32 %v473, %v477
    %v480 = vpack.c.bf16 %v479, %v478
    %v481 = vld [vmem:[#allocation10] sm:$0xf]
    %v482 = vld [vmem:[#allocation10 + $0x4] sm:$0xf]
    %v483 = vld [vmem:[#allocation10 + $0x8] sm:$0xf]
    %v484 = vld [vmem:[#allocation10 + $0xc] sm:$0xf]
    %v485 = vld [vmem:[#allocation10 + $0x10] sm:$0xf]
    %v486 = vld [vmem:[#allocation10 + $0x14] sm:$0xf]
    %v487 = vld [vmem:[#allocation10 + $0x18] sm:$0xf]
    %v488 = vld [vmem:[#allocation10 + $0x1c] sm:$0xf]
    %v489 = vld [vmem:[#allocation10 + $0x20] sm:$0xf]
    %v490 = vld [vmem:[#allocation10 + $0x24] sm:$0xf]
    %v491 = vld [vmem:[#allocation10 + $0x28] sm:$0xf]
    %v492 = vld [vmem:[#allocation10 + $0x2c] sm:$0xf]
    %v493 = vld [vmem:[#allocation10 + $0x30] sm:$0xf]
    %v494 = vld [vmem:[#allocation10 + $0x34] sm:$0xf]
    %v495 = vld [vmem:[#allocation10 + $0x38] sm:$0xf]
    %v496 = vld [vmem:[#allocation10 + $0x3c] sm:$0xf]
    %v497 = vld [vmem:[%s8] sm:$0x1]
    %v499 = vlaneseq
    %v500 = vshrl.u32 %v499, 7
    %v501 = vsub.s32 0, %v500
    %v502 = vrot.slane %v497, %v501
    %v520 = vunpack.c.l.b16 %v481
    %v521 = vunpack.c.l.b16 %v482
    %v522 = vunpack.c.l.b16 %v483
    %v523 = vunpack.c.l.b16 %v484
    %v524 = vunpack.c.l.b16 %v485
    %v525 = vunpack.c.l.b16 %v486
    %v526 = vunpack.c.l.b16 %v487
    %v527 = vunpack.c.l.b16 %v488
    %v528 = vunpack.c.l.b16 %v489
    %v529 = vunpack.c.l.b16 %v490
    %v530 = vunpack.c.l.b16 %v491
    %v531 = vunpack.c.l.b16 %v492
    %v532 = vunpack.c.l.b16 %v493
    %v533 = vunpack.c.l.b16 %v494
    %v534 = vunpack.c.l.b16 %v495
    %v535 = vunpack.c.l.b16 %v496
    %v536 = vpack.c.b16 %v521, %v520
    %v537 = vpack.c.b16 %v523, %v522
    %v538 = vpack.c.b16 %v525, %v524
    %v539 = vpack.c.b16 %v527, %v526
    %v540 = vpack.c.b16 %v529, %v528
    %v541 = vpack.c.b16 %v531, %v530
    %v542 = vpack.c.b16 %v533, %v532
    %v543 = vpack.c.b16 %v535, %v534
    %552 = vmatprep.subr.bf16.mxu0 0
    %553 = vmatpush1.bf16.msra.mxu0 %v536
    %554 = vmatprep.subr.bf16.mxu0 0
    %555 = vmatpush1.bf16.msra.mxu0 %v537
    %556 = vmatprep.subr.bf16.mxu0 0
    %557 = vmatpush1.bf16.msra.mxu0 %v538
    %558 = vmatprep.subr.bf16.mxu0 0
    %559 = vmatpush1.bf16.msra.mxu0 %v539
    %560 = vmatprep.subr.bf16.mxu0 0
    %561 = vmatpush1.bf16.msra.mxu0 %v540
    %562 = vmatprep.subr.bf16.mxu0 0
    %563 = vmatpush1.bf16.msra.mxu0 %v541
    %564 = vmatprep.subr.bf16.mxu0 0
    %565 = vmatpush1.bf16.msra.mxu0 %v542
    %566 = vmatprep.subr.bf16.mxu0 0
    %567 = vmatpush1.bf16.msra.mxu0 %v543
    %568 = vmatprep.subr.bf16.mxu0 0
    %569 = vmatpush1.bf16.msra.mxu0 0
    %570 = vmatprep.subr.bf16.mxu0 0
    %571 = vmatpush1.bf16.msra.mxu0 0
    %572 = vmatprep.subr.bf16.mxu0 0
    %573 = vmatpush1.bf16.msra.mxu0 0
    %574 = vmatprep.subr.bf16.mxu0 0
    %575 = vmatpush1.bf16.msra.mxu0 0
    %576 = vmatprep.subr.bf16.mxu0 0
    %577 = vmatpush1.bf16.msra.mxu0 0
    %578 = vmatprep.subr.bf16.mxu0 0
    %579 = vmatpush1.bf16.msra.mxu0 0
    %580 = vmatprep.subr.bf16.mxu0 0
    %581 = vmatpush1.bf16.msra.mxu0 0
    %582 = vmatprep.subr.bf16.mxu0 0
    %583 = vmatpush1.bf16.msra.mxu0 0
    %584 = vmatprep.mubr.bf16.mxu0 0
    %585 = vmatmul.mubr.bf16.gmra.mrb[0].mxu0 %v480
    %v586 = vpop.f32.mrb[0].mxu0
    %v587 = vadd.f32 %v502, %v586
    %v588 = vpop.f32.mrb[0].mxu0
    %v589 = vpop.f32.mrb[0].mxu0
    %v590 = vadd.f32 %v502, %v589
    %v591 = vpop.f32.mrb[0].mxu0
    %592 = vdwg.mxu0
    %v593 = vmul.f32 %v587, 0.01
    %v594 = vmul.f32 %v590, 0.01
    %v595 = vmax.f32 %v587, %v593
    %v596 = vmax.f32 %v590, %v594
    %v597 = vpack.c.bf16 %v596, %v595
    %v598 = vld [vmem:[#allocation11] sm:$0xf]
    %v599 = vld [vmem:[#allocation11 + $0x4] sm:$0xf]
    %v600 = vld [vmem:[#allocation11 + $0x8] sm:$0xf]
    %v601 = vld [vmem:[#allocation11 + $0xc] sm:$0xf]
    %v602 = vld [vmem:[#allocation11 + $0x10] sm:$0xf]
    %v603 = vld [vmem:[#allocation11 + $0x14] sm:$0xf]
    %v604 = vld [vmem:[#allocation11 + $0x18] sm:$0xf]
    %v605 = vld [vmem:[#allocation11 + $0x1c] sm:$0xf]
    %v606 = vld [vmem:[#allocation11 + $0x20] sm:$0xf]
    %v607 = vld [vmem:[#allocation11 + $0x24] sm:$0xf]
    %v608 = vld [vmem:[#allocation11 + $0x28] sm:$0xf]
    %v609 = vld [vmem:[#allocation11 + $0x2c] sm:$0xf]
    %v610 = vld [vmem:[#allocation11 + $0x30] sm:$0xf]
    %v611 = vld [vmem:[#allocation11 + $0x34] sm:$0xf]
    %v612 = vld [vmem:[#allocation11 + $0x38] sm:$0xf]
    %v613 = vld [vmem:[#allocation11 + $0x3c] sm:$0xf]
    %v614 = vld [vmem:[%s10] sm:$0x1]
    %v616 = vlaneseq
    %v617 = vshrl.u32 %v616, 7
    %v618 = vsub.s32 0, %v617
    %v619 = vrot.slane %v614, %v618
    %v637 = vunpack.c.l.b16 %v598
    %v638 = vunpack.c.l.b16 %v599
    %v639 = vunpack.c.l.b16 %v600
    %v640 = vunpack.c.l.b16 %v601
    %v641 = vunpack.c.l.b16 %v602
    %v642 = vunpack.c.l.b16 %v603
    %v643 = vunpack.c.l.b16 %v604
    %v644 = vunpack.c.l.b16 %v605
    %v645 = vunpack.c.l.b16 %v606
    %v646 = vunpack.c.l.b16 %v607
    %v647 = vunpack.c.l.b16 %v608
    %v648 = vunpack.c.l.b16 %v609
    %v649 = vunpack.c.l.b16 %v610
    %v650 = vunpack.c.l.b16 %v611
    %v651 = vunpack.c.l.b16 %v612
    %v652 = vunpack.c.l.b16 %v613
    %v653 = vpack.c.b16 %v638, %v637
    %v654 = vpack.c.b16 %v640, %v639
    %v655 = vpack.c.b16 %v642, %v641
    %v656 = vpack.c.b16 %v644, %v643
    %v657 = vpack.c.b16 %v646, %v645
    %v658 = vpack.c.b16 %v648, %v647
    %v659 = vpack.c.b16 %v650, %v649
    %v660 = vpack.c.b16 %v652, %v651
    %669 = vmatprep.subr.bf16.mxu0 0
    %670 = vmatpush1.bf16.msra.mxu0 %v653
    %671 = vmatprep.subr.bf16.mxu0 0
    %672 = vmatpush1.bf16.msra.mxu0 %v654
    %673 = vmatprep.subr.bf16.mxu0 0
    %674 = vmatpush1.bf16.msra.mxu0 %v655
    %675 = vmatprep.subr.bf16.mxu0 0
    %676 = vmatpush1.bf16.msra.mxu0 %v656
    %677 = vmatprep.subr.bf16.mxu0 0
    %678 = vmatpush1.bf16.msra.mxu0 %v657
    %679 = vmatprep.subr.bf16.mxu0 0
    %680 = vmatpush1.bf16.msra.mxu0 %v658
    %681 = vmatprep.subr.bf16.mxu0 0
    %682 = vmatpush1.bf16.msra.mxu0 %v659
    %683 = vmatprep.subr.bf16.mxu0 0
    %684 = vmatpush1.bf16.msra.mxu0 %v660
    %685 = vmatprep.subr.bf16.mxu0 0
    %686 = vmatpush1.bf16.msra.mxu0 0
    %687 = vmatprep.subr.bf16.mxu0 0
    %688 = vmatpush1.bf16.msra.mxu0 0
    %689 = vmatprep.subr.bf16.mxu0 0
    %690 = vmatpush1.bf16.msra.mxu0 0
    %691 = vmatprep.subr.bf16.mxu0 0
    %692 = vmatpush1.bf16.msra.mxu0 0
    %693 = vmatprep.subr.bf16.mxu0 0
    %694 = vmatpush1.bf16.msra.mxu0 0
    %695 = vmatprep.subr.bf16.mxu0 0
    %696 = vmatpush1.bf16.msra.mxu0 0
    %697 = vmatprep.subr.bf16.mxu0 0
    %698 = vmatpush1.bf16.msra.mxu0 0
    %699 = vmatprep.subr.bf16.mxu0 0
    %700 = vmatpush1.bf16.msra.mxu0 0
    %701 = vmatprep.mubr.bf16.mxu0 0
    %702 = vmatmul.mubr.bf16.gmra.mrb[0].mxu0 %v597
    %v703 = vpop.f32.mrb[0].mxu0
    %v704 = vadd.f32 %v619, %v703
    %v705 = vpop.f32.mrb[0].mxu0
    %v706 = vpop.f32.mrb[0].mxu0
    %v707 = vadd.f32 %v619, %v706
    %v708 = vpop.f32.mrb[0].mxu0
    %709 = vdwg.mxu0
    %710 = vst [vmem:[#allocation13] sm:$0xff] %v704
    %711 = vst [vmem:[#allocation13 + $0x8] sm:$0xff] %v707
    // Predicated region
    $region70: #{tpu_custom_call.1} parent=1 // pred_check
      _
    $region71: #{tpu_custom_call.1} parent=1 // pred_check_branch
      %713 = sbr.rel (0) target = $region73
    $region72: #{tpu_custom_call.1} parent=1 // pred_region
      %s715 = ssub.s32 256, 256
      %716 = vsyncadd [#allocation4], %s715
      %s717 = sshll.u32 [#allocation13], 4
      %s718 = int_to_ptr.vmem [resolvable:$true] %s717
      %723 = dma.vmem_to_hbm [thread:$0]  %s718, 256, %s11, [#allocation4], 128, 128, 8
    $region73: #{tpu_custom_call.1} parent=1 // pred_fallthru
      _
    // Predicated region
    $region74: #{tpu_custom_call.1} parent=1 // pred_check
      _
    $region75: #{tpu_custom_call.1} parent=1 // pred_check_branch
      %725 = sbr.rel (0) target = $region77
    $region76: #{tpu_custom_call.1} parent=1 // pred_region
      %726 = dma.done [#allocation4], 256
    $region77: #{tpu_custom_call.1} parent=1 // pred_fallthru
      _
    %727 = vsyncpa [#allocation3], 1
    %728 = vsyncpa [#allocation6], 1
    %729 = vsyncpa [#allocation9], 1
    %730 = vsyncpa [#allocation12], 1
    %731 = vsyncpa [#allocation4], 1

// kernel: tpu_custom_call.1
$region0: #{tpu_custom_call.1}
  #allocation0 [shape = 'u32[]', space=smem, size = 0x4, offset = 0x4, fixed_abs, tag = 'smem constant byte address 0x4 - core index']
  #allocation1 [shape = 'u32[144,128]{1,0:T(1,128)}', space=vmem, size = 0x12000, scoped, tag = 'internal scratch']
  %s0 = inlined_call_operand.hbm [shape: bf16[16,128], index: 0, kind: input, shape index: {}]
  %s1 = inlined_call_operand.hbm [shape: bf16[128,128], index: 1, kind: input, shape index: {}]
  %s2 = inlined_call_operand.vmem [shape: f32[1,128], index: 2, kind: input, shape index: {}]
  %s3 = inlined_call_operand.hbm [shape: bf16[128,128], index: 3, kind: input, shape index: {}]
  %s4 = inlined_call_operand.vmem [shape: f32[1,128], index: 4, kind: input, shape index: {}]
  %s5 = inlined_call_operand.hbm [shape: bf16[128,128], index: 5, kind: input, shape index: {}]
  %s6 = inlined_call_operand.vmem [shape: f32[1,128], index: 6, kind: input, shape index: {}]
  %s7 = inlined_call_operand.hbm [shape: bf16[128,128], index: 7, kind: input, shape index: {}]
  %s8 = inlined_call_operand.vmem [shape: f32[1,128], index: 8, kind: input, shape index: {}]
  %s9 = inlined_call_operand.hbm [shape: bf16[128,128], index: 9, kind: input, shape index: {}]
  %s10 = inlined_call_operand.vmem [shape: f32[1,128], index: 10, kind: input, shape index: {}]
  %s11 = inlined_call_operand.hbm [shape: f32[16,128], index: 11, kind: output, shape index: {}]
  %s12 = sld [smem:[#allocation0]]
  $region78: #{tpu_custom_call.1} parent=0
    _
  %s14 = ssub.s32 1, %s12
  %s15 = scalar_select 0, %s14, %s12
  $region1: #{tpu_custom_call.1} parent=0
    #allocation2 [shape = 'u8[4096]{0}', space=vmem, size = 0x1000, scoped, tag = 'input window, operand 0, single buffered']
    #allocation3 [shape = 's32[1]{0}', space=sflag, size = 0x4, scoped, tag = 'scoped memory for tpu_custom_call.1']
    #allocation4 [shape = 's32[1]{0}', space=sflag, size = 0x4, scoped, tag = 'scoped memory for tpu_custom_call.1']
    #allocation5 [shape = 'u8[32768]{0}', space=vmem, size = 0x8000, scoped, tag = 'input window, operand 1, single buffered']
    #allocation6 [shape = 's32[1]{0}', space=sflag, size = 0x4, scoped, tag = 'scoped memory for tpu_custom_call.1']
    #allocation7 [shape = 'u8[32768]{0}', space=vmem, size = 0x8000, scoped, tag = 'input window, operand 3, single buffered']
    #allocation8 [shape = 'u8[32768]{0}', space=vmem, size = 0x8000, scoped, tag = 'input window, operand 5, single buffered']
    #allocation9 [shape = 's32[1]{0}', space=sflag, size = 0x4, scoped, tag = 'scoped memory for tpu_custom_call.1']
    #allocation10 [shape = 'u8[32768]{0}', space=vmem, size = 0x8000, scoped, tag = 'input window, operand 7, single buffered']
    #allocation11 [shape = 'u8[32768]{0}', space=vmem, size = 0x8000, scoped, tag = 'input window, operand 9, single buffered']
    #allocation12 [shape = 's32[1]{0}', space=sflag, size = 0x4, scoped, tag = 'scoped memory for tpu_custom_call.1']
    #allocation13 [shape = 'u8[8192]{0}', space=vmem, size = 0x2000, scoped, tag = 'output window, operand 0, single buffered']
    %16 = vsyncpa [#allocation3], 0
    %17 = vsyncpa [#allocation6], 0
    %18 = vsyncpa [#allocation9], 0
    %19 = vsyncpa [#allocation12], 0
    %20 = vsyncpa [#allocation4], 0
    // Predicated region
    $region2: #{tpu_custom_call.1} parent=1 // pred_check
      _
    $region3: #{tpu_custom_call.1} parent=1 // pred_check_branch
      %22 = sbr.rel (0) target = $region5
    $region4: #{tpu_custom_call.1} parent=1 // pred_region
      %s24 = ssub.s32 128, 128
      %25 = vsyncadd [#allocation3], %s24
      %s26 = sshll.u32 [#allocation2], 4
      %s27 = int_to_ptr.vmem [resolvable:$true] %s26
      %32 = dma.hbm_to_vmem [thread:$0]  %s0, 128, %s27, [#allocation3], 64, 64, 4
    $region5: #{tpu_custom_call.1} parent=1 // pred_fallthru
      _
    // Predicated region
    $region6: #{tpu_custom_call.1} parent=1 // pred_check
      _
    $region7: #{tpu_custom_call.1} parent=1 // pred_check_branch
      %34 = sbr.rel (0) target = $region9
    $region8: #{tpu_custom_call.1} parent=1 // pred_region
      %s36 = ssub.s32 1024, 1024
      %37 = vsyncadd [#allocation6], %s36
      %s38 = sshll.u32 [#allocation5], 4
      %s39 = int_to_ptr.vmem [resolvable:$true] %s38
      %44 = dma.hbm_to_vmem [thread:$0]  %s1, 1024, %s39, [#allocation6], 64, 64, 4
    $region9: #{tpu_custom_call.1} parent=1 // pred_fallthru
      _
    // Predicated region
    $region10: #{tpu_custom_call.1} parent=1 // pred_check
      _
    $region11: #{tpu_custom_call.1} parent=1 // pred_check_branch
      %46 = sbr.rel (0) target = $region13
    $region12: #{tpu_custom_call.1} parent=1 // pred_region
      _
    $region13: #{tpu_custom_call.1} parent=1 // pred_fallthru
      _
    // Predicated region
    $region14: #{tpu_custom_call.1} parent=1 // pred_check
      _
    $region15: #{tpu_custom_call.1} parent=1 // pred_check_branch
      %48 = sbr.rel (0) target = $region17
    $region16: #{tpu_custom_call.1} parent=1 // pred_region
      %s50 = ssub.s32 1024, 1024
      %51 = vsyncadd [#allocation6], %s50
      %s52 = sshll.u32 [#allocation7], 4
      %s53 = int_to_ptr.vmem [resolvable:$true] %s52
      %58 = dma.hbm_to_vmem [thread:$0]  %s3, 1024, %s53, [#allocation6], 64, 64, 4
    $region17: #{tpu_custom_call.1} parent=1 // pred_fallthru
      _
    // Predicated region
    $region18: #{tpu_custom_call.1} parent=1 // pred_check
      _
    $region19: #{tpu_custom_call.1} parent=1 // pred_check_branch
      %60 = sbr.rel (0) target = $region21
    $region20: #{tpu_custom_call.1} parent=1 // pred_region
      _
    $region21: #{tpu_custom_call.1} parent=1 // pred_fallthru
      _
    // Predicated region
    $region22: #{tpu_custom_call.1} parent=1 // pred_check
      _
    $region23: #{tpu_custom_call.1} parent=1 // pred_check_branch
      %62 = sbr.rel (0) target = $region25
    $region24: #{tpu_custom_call.1} parent=1 // pred_region
      %s64 = ssub.s32 1024, 1024
      %65 = vsyncadd [#allocation9], %s64
      %s66 = sshll.u32 [#allocation8], 4
      %s67 = int_to_ptr.vmem [resolvable:$true] %s66
      %72 = dma.hbm_to_vmem [thread:$0]  %s5, 1024, %s67, [#allocation9], 64, 64, 4
    $region25: #{tpu_custom_call.1} parent=1 // pred_fallthru
      _
    // Predicated region
    $region26: #{tpu_custom_call.1} parent=1 // pred_check
      _
    $region27: #{tpu_custom_call.1} parent=1 // pred_check_branch
      %74 = sbr.rel (0) target = $region29
    $region28: #{tpu_custom_call.1} parent=1 // pred_region
      _
    $region29: #{tpu_custom_call.1} parent=1 // pred_fallthru
      _
    // Predicated region
    $region30: #{tpu_custom_call.1} parent=1 // pred_check
      _
    $region31: #{tpu_custom_call.1} parent=1 // pred_check_branch
      %76 = sbr.rel (0) target = $region33
    $region32: #{tpu_custom_call.1} parent=1 // pred_region
      %s78 = ssub.s32 1024, 1024
      %79 = vsyncadd [#allocation9], %s78
      %s80 = sshll.u32 [#allocation10], 4
      %s81 = int_to_ptr.vmem [resolvable:$true] %s80
      %86 = dma.hbm_to_vmem [thread:$0]  %s7, 1024, %s81, [#allocation9], 64, 64, 4
    $region33: #{tpu_custom_call.1} parent=1 // pred_fallthru
      _
    // Predicated region
    $region34: #{tpu_custom_call.1} parent=1 // pred_check
      _
    $region35: #{tpu_custom_call.1} parent=1 // pred_check_branch
      %88 = sbr.rel (0) target = $region37
    $region36: #{tpu_custom_call.1} parent=1 // pred_region
      _
    $region37: #{tpu_custom_call.1} parent=1 // pred_fallthru
      _
    // Predicated region
    $region38: #{tpu_custom_call.1} parent=1 // pred_check
      _
    $region39: #{tpu_custom_call.1} parent=1 // pred_check_branch
      %90 = sbr.rel (0) target = $region41
    $region40: #{tpu_custom_call.1} parent=1 // pred_region
      %s92 = ssub.s32 1024, 1024
      %93 = vsyncadd [#allocation12], %s92
      %s94 = sshll.u32 [#allocation11], 4
      %s95 = int_to_ptr.vmem [resolvable:$true] %s94
      %100 = dma.hbm_to_vmem [thread:$0]  %s9, 1024, %s95, [#allocation12], 64, 64, 4
    $region41: #{tpu_custom_call.1} parent=1 // pred_fallthru
      _
    // Predicated region
    $region42: #{tpu_custom_call.1} parent=1 // pred_check
      _
    $region43: #{tpu_custom_call.1} parent=1 // pred_check_branch
      %102 = sbr.rel (0) target = $region45
    $region44: #{tpu_custom_call.1} parent=1 // pred_region
      _
    $region45: #{tpu_custom_call.1} parent=1 // pred_fallthru
      _
    // Predicated region
    $region46: #{tpu_custom_call.1} parent=1 // pred_check
      _
    $region47: #{tpu_custom_call.1} parent=1 // pred_check_branch
      %104 = sbr.rel (0) target = $region49
    $region48: #{tpu_custom_call.1} parent=1 // pred_region
      %105 = dma.done [#allocation3], 128
    $region49: #{tpu_custom_call.1} parent=1 // pred_fallthru
      _
    // Predicated region
    $region50: #{tpu_custom_call.1} parent=1 // pred_check
      _
    $region51: #{tpu_custom_call.1} parent=1 // pred_check_branch
      %107 = sbr.rel (0) target = $region53
    $region52: #{tpu_custom_call.1} parent=1 // pred_region
      %108 = dma.done [#allocation6], 1024
    $region53: #{tpu_custom_call.1} parent=1 // pred_fallthru
      _
    // Predicated region
    $region54: #{tpu_custom_call.1} parent=1 // pred_check
      _
    $region55: #{tpu_custom_call.1} parent=1 // pred_check_branch
      %110 = sbr.rel (0) target = $region57
    $region56: #{tpu_custom_call.1} parent=1 // pred_region
      %111 = dma.done [#allocation6], 1024
    $region57: #{tpu_custom_call.1} parent=1 // pred_fallthru
      _
    // Predicated region
    $region58: #{tpu_custom_call.1} parent=1 // pred_check
      _
    $region59: #{tpu_custom_call.1} parent=1 // pred_check_branch
      %113 = sbr.rel (0) target = $region61
    $region60: #{tpu_custom_call.1} parent=1 // pred_region
      %114 = dma.done [#allocation9], 1024
    $region61: #{tpu_custom_call.1} parent=1 // pred_fallthru
      _
    // Predicated region
    $region62: #{tpu_custom_call.1} parent=1 // pred_check
      _
    $region63: #{tpu_custom_call.1} parent=1 // pred_check_branch
      %116 = sbr.rel (0) target = $region65
    $region64: #{tpu_custom_call.1} parent=1 // pred_region
      %117 = dma.done [#allocation9], 1024
    $region65: #{tpu_custom_call.1} parent=1 // pred_fallthru
      _
    // Predicated region
    $region66: #{tpu_custom_call.1} parent=1 // pred_check
      _
    $region67: #{tpu_custom_call.1} parent=1 // pred_check_branch
      %119 = sbr.rel (0) target = $region69
    $region68: #{tpu_custom_call.1} parent=1 // pred_region
      %120 = dma.done [#allocation12], 1024
    $region69: #{tpu_custom_call.1} parent=1 // pred_fallthru
      _
    %v122 = vld [vmem:[#allocation2] sm:$0xf]
    %v123 = vld [vmem:[#allocation2 + $0x4] sm:$0xf]
    %v124 = vld [vmem:[#allocation5] sm:$0xf]
    %v125 = vld [vmem:[#allocation5 + $0x4] sm:$0xf]
    %v126 = vld [vmem:[#allocation5 + $0x8] sm:$0xf]
    %v127 = vld [vmem:[#allocation5 + $0xc] sm:$0xf]
    %v128 = vld [vmem:[#allocation5 + $0x10] sm:$0xf]
    %v129 = vld [vmem:[#allocation5 + $0x14] sm:$0xf]
    %v130 = vld [vmem:[#allocation5 + $0x18] sm:$0xf]
    %v131 = vld [vmem:[#allocation5 + $0x1c] sm:$0xf]
    %v132 = vld [vmem:[#allocation5 + $0x20] sm:$0xf]
    %v133 = vld [vmem:[#allocation5 + $0x24] sm:$0xf]
    %v134 = vld [vmem:[#allocation5 + $0x28] sm:$0xf]
    %v135 = vld [vmem:[#allocation5 + $0x2c] sm:$0xf]
    %v136 = vld [vmem:[#allocation5 + $0x30] sm:$0xf]
    %v137 = vld [vmem:[#allocation5 + $0x34] sm:$0xf]
    %v138 = vld [vmem:[#allocation5 + $0x38] sm:$0xf]
    %v139 = vld [vmem:[#allocation5 + $0x3c] sm:$0xf]
    %v140 = vld [vmem:[%s2] sm:$0x1]
    %v142 = vlaneseq
    %v143 = vshrl.u32 %v142, 7
    %v144 = vsub.s32 0, %v143
    %v145 = vrot.slane %v140, %v144
    %v149 = vunpack.c.l.b16 %v122
    %v150 = vunpack.c.l.b16 %v123
    %v151 = vpack.c.b16 %v150, %v149
    %v169 = vunpack.c.l.b16 %v124
    %v170 = vunpack.c.l.b16 %v125
    %v171 = vunpack.c.l.b16 %v126
    %v172 = vunpack.c.l.b16 %v127
    %v173 = vunpack.c.l.b16 %v128
    %v174 = vunpack.c.l.b16 %v129
    %v175 = vunpack.c.l.b16 %v130
    %v176 = vunpack.c.l.b16 %v131
    %v177 = vunpack.c.l.b16 %v132
    %v178 = vunpack.c.l.b16 %v133
    %v179 = vunpack.c.l.b16 %v134
    %v180 = vunpack.c.l.b16 %v135
    %v181 = vunpack.c.l.b16 %v136
    %v182 = vunpack.c.l.b16 %v137
    %v183 = vunpack.c.l.b16 %v138
    %v184 = vunpack.c.l.b16 %v139
    %v185 = vpack.c.b16 %v170, %v169
    %v186 = vpack.c.b16 %v172, %v171
    %v187 = vpack.c.b16 %v174, %v173
    %v188 = vpack.c.b16 %v176, %v175
    %v189 = vpack.c.b16 %v178, %v177
    %v190 = vpack.c.b16 %v180, %v179
    %v191 = vpack.c.b16 %v182, %v181
    %v192 = vpack.c.b16 %v184, %v183
    %201 = vmatprep.subr.bf16.mxu0 0
    %202 = vmatpush1.bf16.msra.mxu0 %v185
    %203 = vmatprep.subr.bf16.mxu0 0
    %204 = vmatpush1.bf16.msra.mxu0 %v186
    %205 = vmatprep.subr.bf16.mxu0 0
    %206 = vmatpush1.bf16.msra.mxu0 %v187
    %207 = vmatprep.subr.bf16.mxu0 0
    %208 = vmatpush1.bf16.msra.mxu0 %v188
    %209 = vmatprep.subr.bf16.mxu0 0
    %210 = vmatpush1.bf16.msra.mxu0 %v189
    %211 = vmatprep.subr.bf16.mxu0 0
    %212 = vmatpush1.bf16.msra.mxu0 %v190
    %213 = vmatprep.subr.bf16.mxu0 0
    %214 = vmatpush1.bf16.msra.mxu0 %v191
    %215 = vmatprep.subr.bf16.mxu0 0
    %216 = vmatpush1.bf16.msra.mxu0 %v192
    %217 = vmatprep.subr.bf16.mxu0 0
    %218 = vmatpush1.bf16.msra.mxu0 0
    %219 = vmatprep.subr.bf16.mxu0 0
    %220 = vmatpush1.bf16.msra.mxu0 0
    %221 = vmatprep.subr.bf16.mxu0 0
    %222 = vmatpush1.bf16.msra.mxu0 0
    %223 = vmatprep.subr.bf16.mxu0 0
    %224 = vmatpush1.bf16.msra.mxu0 0
    %225 = vmatprep.subr.bf16.mxu0 0
    %226 = vmatpush1.bf16.msra.mxu0 0
    %227 = vmatprep.subr.bf16.mxu0 0
    %228 = vmatpush1.bf16.msra.mxu0 0
    %229 = vmatprep.subr.bf16.mxu0 0
    %230 = vmatpush1.bf16.msra.mxu0 0
    %231 = vmatprep.subr.bf16.mxu0 0
    %232 = vmatpush1.bf16.msra.mxu0 0
    %233 = vmatprep.mubr.bf16.mxu0 0
    %234 = vmatmul.mubr.bf16.gmra.mrb[0].mxu0 %v151
    %v235 = vpop.f32.mrb[0].mxu0
    %v236 = vadd.f32 %v145, %v235
    %v237 = vpop.f32.mrb[0].mxu0
    %v238 = vpop.f32.mrb[0].mxu0
    %v239 = vadd.f32 %v145, %v238
    %v240 = vpop.f32.mrb[0].mxu0
    %241 = vdwg.mxu0
    %v242 = vmul.f32 %v236, 0.01
    %v243 = vmul.f32 %v239, 0.01
    %v244 = vmax.f32 %v236, %v242
    %v245 = vmax.f32 %v239, %v243
    %v246 = vpack.c.bf16 %v245, %v244
    %v247 = vld [vmem:[#allocation7] sm:$0xf]
    %v248 = vld [vmem:[#allocation7 + $0x4] sm:$0xf]
    %v249 = vld [vmem:[#allocation7 + $0x8] sm:$0xf]
    %v250 = vld [vmem:[#allocation7 + $0xc] sm:$0xf]
    %v251 = vld [vmem:[#allocation7 + $0x10] sm:$0xf]
    %v252 = vld [vmem:[#allocation7 + $0x14] sm:$0xf]
    %v253 = vld [vmem:[#allocation7 + $0x18] sm:$0xf]
    %v254 = vld [vmem:[#allocation7 + $0x1c] sm:$0xf]
    %v255 = vld [vmem:[#allocation7 + $0x20] sm:$0xf]
    %v256 = vld [vmem:[#allocation7 + $0x24] sm:$0xf]
    %v257 = vld [vmem:[#allocation7 + $0x28] sm:$0xf]
    %v258 = vld [vmem:[#allocation7 + $0x2c] sm:$0xf]
    %v259 = vld [vmem:[#allocation7 + $0x30] sm:$0xf]
    %v260 = vld [vmem:[#allocation7 + $0x34] sm:$0xf]
    %v261 = vld [vmem:[#allocation7 + $0x38] sm:$0xf]
    %v262 = vld [vmem:[#allocation7 + $0x3c] sm:$0xf]
    %v263 = vld [vmem:[%s4] sm:$0x1]
    %v265 = vlaneseq
    %v266 = vshrl.u32 %v265, 7
    %v267 = vsub.s32 0, %v266
    %v268 = vrot.slane %v263, %v267
    %v286 = vunpack.c.l.b16 %v247
    %v287 = vunpack.c.l.b16 %v248
    %v288 = vunpack.c.l.b16 %v249
    %v289 = vunpack.c.l.b16 %v250
    %v290 = vunpack.c.l.b16 %v251
    %v291 = vunpack.c.l.b16 %v252
    %v292 = vunpack.c.l.b16 %v253
    %v293 = vunpack.c.l.b16 %v254
    %v294 = vunpack.c.l.b16 %v255
    %v295 = vunpack.c.l.b16 %v256
    %v296 = vunpack.c.l.b16 %v257
    %v297 = vunpack.c.l.b16 %v258
    %v298 = vunpack.c.l.b16 %v259
    %v299 = vunpack.c.l.b16 %v260
    %v300 = vunpack.c.l.b16 %v261
    %v301 = vunpack.c.l.b16 %v262
    %v302 = vpack.c.b16 %v287, %v286
    %v303 = vpack.c.b16 %v289, %v288
    %v304 = vpack.c.b16 %v291, %v290
    %v305 = vpack.c.b16 %v293, %v292
    %v306 = vpack.c.b16 %v295, %v294
    %v307 = vpack.c.b16 %v297, %v296
    %v308 = vpack.c.b16 %v299, %v298
    %v309 = vpack.c.b16 %v301, %v300
    %318 = vmatprep.subr.bf16.mxu0 0
    %319 = vmatpush1.bf16.msra.mxu0 %v302
    %320 = vmatprep.subr.bf16.mxu0 0
    %321 = vmatpush1.bf16.msra.mxu0 %v303
    %322 = vmatprep.subr.bf16.mxu0 0
    %323 = vmatpush1.bf16.msra.mxu0 %v304
    %324 = vmatprep.subr.bf16.mxu0 0
    %325 = vmatpush1.bf16.msra.mxu0 %v305
    %326 = vmatprep.subr.bf16.mxu0 0
    %327 = vmatpush1.bf16.msra.mxu0 %v306
    %328 = vmatprep.subr.bf16.mxu0 0
    %329 = vmatpush1.bf16.msra.mxu0 %v307
    %330 = vmatprep.subr.bf16.mxu0 0
    %331 = vmatpush1.bf16.msra.mxu0 %v308
    %332 = vmatprep.subr.bf16.mxu0 0
    %333 = vmatpush1.bf16.msra.mxu0 %v309
    %334 = vmatprep.subr.bf16.mxu0 0
    %335 = vmatpush1.bf16.msra.mxu0 0
    %336 = vmatprep.subr.bf16.mxu0 0
    %337 = vmatpush1.bf16.msra.mxu0 0
    %338 = vmatprep.subr.bf16.mxu0 0
    %339 = vmatpush1.bf16.msra.mxu0 0
    %340 = vmatprep.subr.bf16.mxu0 0
    %341 = vmatpush1.bf16.msra.mxu0 0
    %342 = vmatprep.subr.bf16.mxu0 0
    %343 = vmatpush1.bf16.msra.mxu0 0
    %344 = vmatprep.subr.bf16.mxu0 0
    %345 = vmatpush1.bf16.msra.mxu0 0
    %346 = vmatprep.subr.bf16.mxu0 0
    %347 = vmatpush1.bf16.msra.mxu0 0
    %348 = vmatprep.subr.bf16.mxu0 0
    %349 = vmatpush1.bf16.msra.mxu0 0
    %350 = vmatprep.mubr.bf16.mxu0 0
    %351 = vmatmul.mubr.bf16.gmra.mrb[0].mxu0 %v246
    %v352 = vpop.f32.mrb[0].mxu0
    %v353 = vadd.f32 %v268, %v352
    %v354 = vpop.f32.mrb[0].mxu0
    %v355 = vpop.f32.mrb[0].mxu0
    %v356 = vadd.f32 %v268, %v355
    %v357 = vpop.f32.mrb[0].mxu0
    %358 = vdwg.mxu0
    %v359 = vmul.f32 %v353, 0.01
    %v360 = vmul.f32 %v356, 0.01
    %v361 = vmax.f32 %v353, %v359
    %v362 = vmax.f32 %v356, %v360
    %v363 = vpack.c.bf16 %v362, %v361
    %v364 = vld [vmem:[#allocation8] sm:$0xf]
    %v365 = vld [vmem:[#allocation8 + $0x4] sm:$0xf]
    %v366 = vld [vmem:[#allocation8 + $0x8] sm:$0xf]
    %v367 = vld [vmem:[#allocation8 + $0xc] sm:$0xf]
    %v368 = vld [vmem:[#allocation8 + $0x10] sm:$0xf]
    %v369 = vld [vmem:[#allocation8 + $0x14] sm:$0xf]
    %v370 = vld [vmem:[#allocation8 + $0x18] sm:$0xf]
    %v371 = vld [vmem:[#allocation8 + $0x1c] sm:$0xf]
    %v372 = vld [vmem:[#allocation8 + $0x20] sm:$0xf]
    %v373 = vld [vmem:[#allocation8 + $0x24] sm:$0xf]
    %v374 = vld [vmem:[#allocation8 + $0x28] sm:$0xf]
    %v375 = vld [vmem:[#allocation8 + $0x2c] sm:$0xf]
    %v376 = vld [vmem:[#allocation8 + $0x30] sm:$0xf]
    %v377 = vld [vmem:[#allocation8 + $0x34] sm:$0xf]
    %v378 = vld [vmem:[#allocation8 + $0x38] sm:$0xf]
    %v379 = vld [vmem:[#allocation8 + $0x3c] sm:$0xf]
    %v380 = vld [vmem:[%s6] sm:$0x1]
    %v382 = vlaneseq
    %v383 = vshrl.u32 %v382, 7
    %v384 = vsub.s32 0, %v383
    %v385 = vrot.slane %v380, %v384
    %v403 = vunpack.c.l.b16 %v364
    %v404 = vunpack.c.l.b16 %v365
    %v405 = vunpack.c.l.b16 %v366
    %v406 = vunpack.c.l.b16 %v367
    %v407 = vunpack.c.l.b16 %v368
    %v408 = vunpack.c.l.b16 %v369
    %v409 = vunpack.c.l.b16 %v370
    %v410 = vunpack.c.l.b16 %v371
    %v411 = vunpack.c.l.b16 %v372
    %v412 = vunpack.c.l.b16 %v373
    %v413 = vunpack.c.l.b16 %v374
    %v414 = vunpack.c.l.b16 %v375
    %v415 = vunpack.c.l.b16 %v376
    %v416 = vunpack.c.l.b16 %v377
    %v417 = vunpack.c.l.b16 %v378
    %v418 = vunpack.c.l.b16 %v379
    %v419 = vpack.c.b16 %v404, %v403
    %v420 = vpack.c.b16 %v406, %v405
    %v421 = vpack.c.b16 %v408, %v407
    %v422 = vpack.c.b16 %v410, %v409
    %v423 = vpack.c.b16 %v412, %v411
    %v424 = vpack.c.b16 %v414, %v413
    %v425 = vpack.c.b16 %v416, %v415
    %v426 = vpack.c.b16 %v418, %v417
    %435 = vmatprep.subr.bf16.mxu0 0
    %436 = vmatpush1.bf16.msra.mxu0 %v419
    %437 = vmatprep.subr.bf16.mxu0 0
    %438 = vmatpush1.bf16.msra.mxu0 %v420
    %439 = vmatprep.subr.bf16.mxu0 0
    %440 = vmatpush1.bf16.msra.mxu0 %v421
    %441 = vmatprep.subr.bf16.mxu0 0
    %442 = vmatpush1.bf16.msra.mxu0 %v422
    %443 = vmatprep.subr.bf16.mxu0 0
    %444 = vmatpush1.bf16.msra.mxu0 %v423
    %445 = vmatprep.subr.bf16.mxu0 0
    %446 = vmatpush1.bf16.msra.mxu0 %v424
    %447 = vmatprep.subr.bf16.mxu0 0
    %448 = vmatpush1.bf16.msra.mxu0 %v425
    %449 = vmatprep.subr.bf16.mxu0 0
    %450 = vmatpush1.bf16.msra.mxu0 %v426
    %451 = vmatprep.subr.bf16.mxu0 0
    %452 = vmatpush1.bf16.msra.mxu0 0
    %453 = vmatprep.subr.bf16.mxu0 0
    %454 = vmatpush1.bf16.msra.mxu0 0
    %455 = vmatprep.subr.bf16.mxu0 0
    %456 = vmatpush1.bf16.msra.mxu0 0
    %457 = vmatprep.subr.bf16.mxu0 0
    %458 = vmatpush1.bf16.msra.mxu0 0
    %459 = vmatprep.subr.bf16.mxu0 0
    %460 = vmatpush1.bf16.msra.mxu0 0
    %461 = vmatprep.subr.bf16.mxu0 0
    %462 = vmatpush1.bf16.msra.mxu0 0
    %463 = vmatprep.subr.bf16.mxu0 0
    %464 = vmatpush1.bf16.msra.mxu0 0
    %465 = vmatprep.subr.bf16.mxu0 0
    %466 = vmatpush1.bf16.msra.mxu0 0
    %467 = vmatprep.mubr.bf16.mxu0 0
    %468 = vmatmul.mubr.bf16.gmra.mrb[0].mxu0 %v363
    %v469 = vpop.f32.mrb[0].mxu0
    %v470 = vadd.f32 %v385, %v469
    %v471 = vpop.f32.mrb[0].mxu0
    %v472 = vpop.f32.mrb[0].mxu0
    %v473 = vadd.f32 %v385, %v472
    %v474 = vpop.f32.mrb[0].mxu0
    %475 = vdwg.mxu0
    %v476 = vmul.f32 %v470, 0.01
    %v477 = vmul.f32 %v473, 0.01
    %v478 = vmax.f32 %v470, %v476
    %v479 = vmax.f32 %v473, %v477
    %v480 = vpack.c.bf16 %v479, %v478
    %v481 = vld [vmem:[#allocation10] sm:$0xf]
    %v482 = vld [vmem:[#allocation10 + $0x4] sm:$0xf]
    %v483 = vld [vmem:[#allocation10 + $0x8] sm:$0xf]
    %v484 = vld [vmem:[#allocation10 + $0xc] sm:$0xf]
    %v485 = vld [vmem:[#allocation10 + $0x10] sm:$0xf]
    %v486 = vld [vmem:[#allocation10 + $0x14] sm:$0xf]
    %v487 = vld [vmem:[#allocation10 + $0x18] sm:$0xf]
    %v488 = vld [vmem:[#allocation10 + $0x1c] sm:$0xf]
    %v489 = vld [vmem:[#allocation10 + $0x20] sm:$0xf]
    %v490 = vld [vmem:[#allocation10 + $0x24] sm:$0xf]
    %v491 = vld [vmem:[#allocation10 + $0x28] sm:$0xf]
    %v492 = vld [vmem:[#allocation10 + $0x2c] sm:$0xf]
    %v493 = vld [vmem:[#allocation10 + $0x30] sm:$0xf]
    %v494 = vld [vmem:[#allocation10 + $0x34] sm:$0xf]
    %v495 = vld [vmem:[#allocation10 + $0x38] sm:$0xf]
    %v496 = vld [vmem:[#allocation10 + $0x3c] sm:$0xf]
    %v497 = vld [vmem:[%s8] sm:$0x1]
    %v499 = vlaneseq
    %v500 = vshrl.u32 %v499, 7
    %v501 = vsub.s32 0, %v500
    %v502 = vrot.slane %v497, %v501
    %v520 = vunpack.c.l.b16 %v481
    %v521 = vunpack.c.l.b16 %v482
    %v522 = vunpack.c.l.b16 %v483
    %v523 = vunpack.c.l.b16 %v484
    %v524 = vunpack.c.l.b16 %v485
    %v525 = vunpack.c.l.b16 %v486
    %v526 = vunpack.c.l.b16 %v487
    %v527 = vunpack.c.l.b16 %v488
    %v528 = vunpack.c.l.b16 %v489
    %v529 = vunpack.c.l.b16 %v490
    %v530 = vunpack.c.l.b16 %v491
    %v531 = vunpack.c.l.b16 %v492
    %v532 = vunpack.c.l.b16 %v493
    %v533 = vunpack.c.l.b16 %v494
    %v534 = vunpack.c.l.b16 %v495
    %v535 = vunpack.c.l.b16 %v496
    %v536 = vpack.c.b16 %v521, %v520
    %v537 = vpack.c.b16 %v523, %v522
    %v538 = vpack.c.b16 %v525, %v524
    %v539 = vpack.c.b16 %v527, %v526
    %v540 = vpack.c.b16 %v529, %v528
    %v541 = vpack.c.b16 %v531, %v530
    %v542 = vpack.c.b16 %v533, %v532
    %v543 = vpack.c.b16 %v535, %v534
    %552 = vmatprep.subr.bf16.mxu0 0
    %553 = vmatpush1.bf16.msra.mxu0 %v536
    %554 = vmatprep.subr.bf16.mxu0 0
    %555 = vmatpush1.bf16.msra.mxu0 %v537
    %556 = vmatprep.subr.bf16.mxu0 0
    %557 = vmatpush1.bf16.msra.mxu0 %v538
    %558 = vmatprep.subr.bf16.mxu0 0
    %559 = vmatpush1.bf16.msra.mxu0 %v539
    %560 = vmatprep.subr.bf16.mxu0 0
    %561 = vmatpush1.bf16.msra.mxu0 %v540
    %562 = vmatprep.subr.bf16.mxu0 0
    %563 = vmatpush1.bf16.msra.mxu0 %v541
    %564 = vmatprep.subr.bf16.mxu0 0
    %565 = vmatpush1.bf16.msra.mxu0 %v542
    %566 = vmatprep.subr.bf16.mxu0 0
    %567 = vmatpush1.bf16.msra.mxu0 %v543
    %568 = vmatprep.subr.bf16.mxu0 0
    %569 = vmatpush1.bf16.msra.mxu0 0
    %570 = vmatprep.subr.bf16.mxu0 0
    %571 = vmatpush1.bf16.msra.mxu0 0
    %572 = vmatprep.subr.bf16.mxu0 0
    %573 = vmatpush1.bf16.msra.mxu0 0
    %574 = vmatprep.subr.bf16.mxu0 0
    %575 = vmatpush1.bf16.msra.mxu0 0
    %576 = vmatprep.subr.bf16.mxu0 0
    %577 = vmatpush1.bf16.msra.mxu0 0
    %578 = vmatprep.subr.bf16.mxu0 0
    %579 = vmatpush1.bf16.msra.mxu0 0
    %580 = vmatprep.subr.bf16.mxu0 0
    %581 = vmatpush1.bf16.msra.mxu0 0
    %582 = vmatprep.subr.bf16.mxu0 0
    %583 = vmatpush1.bf16.msra.mxu0 0
    %584 = vmatprep.mubr.bf16.mxu0 0
    %585 = vmatmul.mubr.bf16.gmra.mrb[0].mxu0 %v480
    %v586 = vpop.f32.mrb[0].mxu0
    %v587 = vadd.f32 %v502, %v586
    %v588 = vpop.f32.mrb[0].mxu0
    %v589 = vpop.f32.mrb[0].mxu0
    %v590 = vadd.f32 %v502, %v589
    %v591 = vpop.f32.mrb[0].mxu0
    %592 = vdwg.mxu0
    %v593 = vmul.f32 %v587, 0.01
    %v594 = vmul.f32 %v590, 0.01
    %v595 = vmax.f32 %v587, %v593
    %v596 = vmax.f32 %v590, %v594
    %v597 = vpack.c.bf16 %v596, %v595
    %v598 = vld [vmem:[#allocation11] sm:$0xf]
    %v599 = vld [vmem:[#allocation11 + $0x4] sm:$0xf]
    %v600 = vld [vmem:[#allocation11 + $0x8] sm:$0xf]
    %v601 = vld [vmem:[#allocation11 + $0xc] sm:$0xf]
    %v602 = vld [vmem:[#allocation11 + $0x10] sm:$0xf]
    %v603 = vld [vmem:[#allocation11 + $0x14] sm:$0xf]
    %v604 = vld [vmem:[#allocation11 + $0x18] sm:$0xf]
    %v605 = vld [vmem:[#allocation11 + $0x1c] sm:$0xf]
    %v606 = vld [vmem:[#allocation11 + $0x20] sm:$0xf]
    %v607 = vld [vmem:[#allocation11 + $0x24] sm:$0xf]
    %v608 = vld [vmem:[#allocation11 + $0x28] sm:$0xf]
    %v609 = vld [vmem:[#allocation11 + $0x2c] sm:$0xf]
    %v610 = vld [vmem:[#allocation11 + $0x30] sm:$0xf]
    %v611 = vld [vmem:[#allocation11 + $0x34] sm:$0xf]
    %v612 = vld [vmem:[#allocation11 + $0x38] sm:$0xf]
    %v613 = vld [vmem:[#allocation11 + $0x3c] sm:$0xf]
    %v614 = vld [vmem:[%s10] sm:$0x1]
    %v616 = vlaneseq
    %v617 = vshrl.u32 %v616, 7
    %v618 = vsub.s32 0, %v617
    %v619 = vrot.slane %v614, %v618
    %v637 = vunpack.c.l.b16 %v598
    %v638 = vunpack.c.l.b16 %v599
    %v639 = vunpack.c.l.b16 %v600
    %v640 = vunpack.c.l.b16 %v601
    %v641 = vunpack.c.l.b16 %v602
    %v642 = vunpack.c.l.b16 %v603
    %v643 = vunpack.c.l.b16 %v604
    %v644 = vunpack.c.l.b16 %v605
    %v645 = vunpack.c.l.b16 %v606
    %v646 = vunpack.c.l.b16 %v607
    %v647 = vunpack.c.l.b16 %v608
    %v648 = vunpack.c.l.b16 %v609
    %v649 = vunpack.c.l.b16 %v610
    %v650 = vunpack.c.l.b16 %v611
    %v651 = vunpack.c.l.b16 %v612
    %v652 = vunpack.c.l.b16 %v613
    %v653 = vpack.c.b16 %v638, %v637
    %v654 = vpack.c.b16 %v640, %v639
    %v655 = vpack.c.b16 %v642, %v641
    %v656 = vpack.c.b16 %v644, %v643
    %v657 = vpack.c.b16 %v646, %v645
    %v658 = vpack.c.b16 %v648, %v647
    %v659 = vpack.c.b16 %v650, %v649
    %v660 = vpack.c.b16 %v652, %v651
    %669 = vmatprep.subr.bf16.mxu0 0
    %670 = vmatpush1.bf16.msra.mxu0 %v653
    %671 = vmatprep.subr.bf16.mxu0 0
    %672 = vmatpush1.bf16.msra.mxu0 %v654
    %673 = vmatprep.subr.bf16.mxu0 0
    %674 = vmatpush1.bf16.msra.mxu0 %v655
    %675 = vmatprep.subr.bf16.mxu0 0
    %676 = vmatpush1.bf16.msra.mxu0 %v656
    %677 = vmatprep.subr.bf16.mxu0 0
    %678 = vmatpush1.bf16.msra.mxu0 %v657
    %679 = vmatprep.subr.bf16.mxu0 0
    %680 = vmatpush1.bf16.msra.mxu0 %v658
    %681 = vmatprep.subr.bf16.mxu0 0
    %682 = vmatpush1.bf16.msra.mxu0 %v659
    %683 = vmatprep.subr.bf16.mxu0 0
    %684 = vmatpush1.bf16.msra.mxu0 %v660
    %685 = vmatprep.subr.bf16.mxu0 0
    %686 = vmatpush1.bf16.msra.mxu0 0
    %687 = vmatprep.subr.bf16.mxu0 0
    %688 = vmatpush1.bf16.msra.mxu0 0
    %689 = vmatprep.subr.bf16.mxu0 0
    %690 = vmatpush1.bf16.msra.mxu0 0
    %691 = vmatprep.subr.bf16.mxu0 0
    %692 = vmatpush1.bf16.msra.mxu0 0
    %693 = vmatprep.subr.bf16.mxu0 0
    %694 = vmatpush1.bf16.msra.mxu0 0
    %695 = vmatprep.subr.bf16.mxu0 0
    %696 = vmatpush1.bf16.msra.mxu0 0
    %697 = vmatprep.subr.bf16.mxu0 0
    %698 = vmatpush1.bf16.msra.mxu0 0
    %699 = vmatprep.subr.bf16.mxu0 0
    %700 = vmatpush1.bf16.msra.mxu0 0
    %701 = vmatprep.mubr.bf16.mxu0 0
    %702 = vmatmul.mubr.bf16.gmra.mrb[0].mxu0 %v597
    %v703 = vpop.f32.mrb[0].mxu0
    %v704 = vadd.f32 %v619, %v703
    %v705 = vpop.f32.mrb[0].mxu0
    %v706 = vpop.f32.mrb[0].mxu0
    %v707 = vadd.f32 %v619, %v706
    %v708 = vpop.f32.mrb[0].mxu0
    %709 = vdwg.mxu0
    %710 = vst [vmem:[#allocation13] sm:$0xff] %v704
    %711 = vst [vmem:[#allocation13 + $0x8] sm:$0xff] %v707
    // Predicated region
    $region70: #{tpu_custom_call.1} parent=1 // pred_check
      _
    $region71: #{tpu_custom_call.1} parent=1 // pred_check_branch
      %713 = sbr.rel (0) target = $region73
    $region72: #{tpu_custom_call.1} parent=1 // pred_region
      %s715 = ssub.s32 256, 256
      %716 = vsyncadd [#allocation4], %s715
      %s717 = sshll.u32 [#allocation13], 4
      %s718 = int_to_ptr.vmem [resolvable:$true] %s717
      %723 = dma.vmem_to_hbm [thread:$0]  %s718, 256, %s11, [#allocation4], 128, 128, 8
    $region73: #{tpu_custom_call.1} parent=1 // pred_fallthru
      _
    // Predicated region
    $region74: #{tpu_custom_call.1} parent=1 // pred_check
      _
    $region75: #{tpu_custom_call.1} parent=1 // pred_check_branch
      %725 = sbr.rel (0) target = $region77
    $region76: #{tpu_custom_call.1} parent=1 // pred_region
      %726 = dma.done [#allocation4], 256
    $region77: #{tpu_custom_call.1} parent=1 // pred_fallthru
      _
    %727 = vsyncpa [#allocation3], 1
    %728 = vsyncpa [#allocation6], 1
    %729 = vsyncpa [#allocation9], 1
    %730 = vsyncpa [#allocation12], 1
    %731 = vsyncpa [#allocation4], 1

</llo_original>
